<compile_context>
chip_gen: v6e
topology: v6e:2x2x1
jax: 0.10.0
libtpu: 0.0.40
codegen_flags: <defaults>
</compile_context>

<pallas_src>
import numpy as np
import jax
import jax.numpy as jnp
from jax.experimental import pallas as pl
from jax.experimental.pallas import tpu as pltpu

# Fixed problem sizes implied by the module (Conv2d 64 -> 3, 3x3).
H, W = 16, 16
HW = H * W
CIN, COUT = 64, 3
KH, KW = 3, 3
NTAP = KH * KW


def _tap_masks():
    """(9, H*W) 0/1 masks: tap t contributes at flat position p iff the
    shifted source pixel lies inside the image (zero-padding semantics)."""
    hh, ww = np.meshgrid(np.arange(H), np.arange(W), indexing="ij")
    hh = hh.reshape(-1)
    ww = ww.reshape(-1)
    out = np.zeros((NTAP, HW), np.float32)
    for kh in range(KH):
        for kw in range(KW):
            dh, dw = kh - 1, kw - 1
            valid = ((hh + dh >= 0) & (hh + dh < H) &
                     (ww + dw >= 0) & (ww + dw < W))
            out[kh * KW + kw] = valid.astype(np.float32)
    return out


def _pick_batch_block(n):
    """Largest divisor of n that keeps >= 2 grid steps (v7x megacore) and
    <= 8 images per step."""
    cap = min(8, max(1, n // 2))
    for b in range(cap, 0, -1):
        if n % b == 0:
            return b
    return 1


def sigma_net_kernel(x_ref, gt_ref, w_ref, m_ref, b_ref, sig_ref, z_ref):
    """One batch block per grid step.

    x_ref  : (B, CIN, HW)   lr_fea_up, channels-first, spatial on lane axis
    gt_ref : (B, COUT, HW)
    w_ref  : (NTAP*COUT, CIN)  conv weight, row = tap*COUT + cout
    m_ref  : (NTAP, HW)        per-tap validity mask (0/1)
    b_ref  : (COUT, 1)         conv bias
    sig_ref: (1,)  SMEM        exp(logSigma)
    z_ref  : (B, COUT, HW)     output
    """
    bsz = x_ref.shape[0]

    x = x_ref[...]                                    # (B, CIN, HW)
    wk = w_ref[...]                                   # (27, CIN)
    wb = jnp.broadcast_to(wk[None, :, :], (bsz,) + wk.shape)

    # All 9 taps in one MXU contraction per image: (B, 27, HW), f32 acc.
    y = jnp.einsum("bkc,bcp->bkp", wb, x,
                   preferred_element_type=jnp.float32)

    acc = jnp.zeros((bsz, COUT, HW), jnp.float32)
    for t in range(NTAP):
        kh, kw = t // KW, t % KW
        shift = (kh - 1) * W + (kw - 1)               # flat-index tap offset
        yt = y[:, t * COUT:(t + 1) * COUT, :]         # (B, COUT, HW)
        k = shift % HW
        if k == 0:
            # Center tap: no shift, mask is all ones.
            acc = acc + yt
        else:
            # Circular lane shift by k: rolled[p] = yt[(p + shift) mod HW];
            # the mask zeroes the wrapped / out-of-image positions.
            rolled = jnp.concatenate([yt[:, :, k:], yt[:, :, :k]], axis=2)
            acc = acc + rolled * m_ref[t:t + 1, :][None, :, :]

    conv = acc + b_ref[...][None, :, :]               # + bias (1, COUT, 1)
    sigma = sig_ref[0]                                # SMEM scalar
    z_ref[...] = ((gt_ref[...] - conv) * sigma).astype(z_ref.dtype)


def flow_upsampler_sigma_net_encode(gt_nchw, lr_fea_nchw, weight, bias,
                                    log_sigma, logdet=0.0):
    """gt_nchw: (N, 3, H, W); lr_fea_nchw: (N, 64, H, W).
    weight: (COUT, CIN, 3, 3) PyTorch conv layout; bias: (COUT,);
    log_sigma: (1,).  Returns (z in NCHW, logdet) like the PyTorch module."""
    N = gt_nchw.shape[0]
    assert gt_nchw.shape == (N, COUT, H, W)
    assert lr_fea_nchw.shape == (N, CIN, H, W)

    # Channels-first + flattened spatial: contiguous (free) reshapes only.
    x = lr_fea_nchw.reshape(N, CIN, HW).astype(jnp.float32)
    gt = gt_nchw.reshape(N, COUT, HW).astype(jnp.float32)

    # (co, ci, kh, kw) -> (kh, kw, co, ci) -> (tap*COUT + co, ci)
    w_all = jnp.transpose(weight, (2, 3, 0, 1)).reshape(NTAP * COUT, CIN)
    w_all = w_all.astype(jnp.float32)
    b = bias.reshape(COUT, 1).astype(jnp.float32)
    sigma = jnp.exp(log_sigma.reshape(1).astype(jnp.float32))
    masks = jnp.asarray(_tap_masks())                 # (9, HW) f32

    B = _pick_batch_block(N)
    grid = (N // B,)

    z = pl.pallas_call(
        sigma_net_kernel,
        out_shape=jax.ShapeDtypeStruct((N, COUT, HW), jnp.float32),
        grid=grid,
        in_specs=[
            pl.BlockSpec((B, CIN, HW), lambda i: (i, 0, 0)),
            pl.BlockSpec((B, COUT, HW), lambda i: (i, 0, 0)),
            pl.BlockSpec((NTAP * COUT, CIN), lambda i: (0, 0)),
            pl.BlockSpec((NTAP, HW), lambda i: (0, 0)),
            pl.BlockSpec((COUT, 1), lambda i: (0, 0)),
            pl.BlockSpec(memory_space=pltpu.MemorySpace.SMEM),
        ],
        out_specs=pl.BlockSpec((B, COUT, HW), lambda i: (i, 0, 0)),
        compiler_params=pltpu.CompilerParams(
            dimension_semantics=("parallel",)),
    )(x, gt, w_all, masks, b, sigma)

    z = z.reshape(N, COUT, H, W)                      # free reshape -> NCHW
    # logdet = logdet + logSigma * thops.pixels(gt) * gt.shape[1]
    pixels = gt_nchw.shape[2] * gt_nchw.shape[3]
    logdet_out = logdet + log_sigma * pixels * gt_nchw.shape[1]
    return z, logdet_out


def _reference_encode(gt_nchw, lr_fea_nchw, weight, bias, log_sigma,
                      logdet=0.0):
    """Pure-JAX reference (lax conv) for correctness checking."""
    conv = jax.lax.conv_general_dilated(
        lr_fea_nchw.astype(jnp.float32), weight.astype(jnp.float32),
        window_strides=(1, 1), padding=((1, 1), (1, 1)),
        dimension_numbers=("NCHW", "OIHW", "NCHW"))
    conv = conv + bias.reshape(1, COUT, 1, 1)
    z = (gt_nchw - conv) * jnp.exp(log_sigma).reshape(1, 1, 1, 1)
    pixels = gt_nchw.shape[2] * gt_nchw.shape[3]
    logdet_out = logdet + log_sigma * pixels * gt_nchw.shape[1]
    return z, logdet_out


if __name__ == "__main__":
    key = jax.random.PRNGKey(0)
    k_gt, k_fea, k_w, k_b = jax.random.split(key, 4)

    N = 8  # exercises batch blocking (B=4) with a 2-step parallel grid
    gt = jax.random.normal(k_gt, (N, COUT, H, W), dtype=jnp.float32)
    lr_fea = jax.random.normal(k_fea, (N, CIN, H, W), dtype=jnp.float32)

    # Deterministic synthetic parameters (shapes from the module __init__).
    weight = 0.05 * jax.random.normal(k_w, (COUT, CIN, KH, KW),
                                      dtype=jnp.float32)
    bias = 0.1 * jax.random.normal(k_b, (COUT,), dtype=jnp.float32)
    log_sigma = jnp.array([0.25], dtype=jnp.float32)  # nn.Parameter value

    z, logdet = flow_upsampler_sigma_net_encode(gt, lr_fea, weight, bias,
                                                log_sigma, logdet=0.0)
    jax.block_until_ready(z)
    jax.block_until_ready(logdet)

    z_ref, logdet_ref = _reference_encode(gt, lr_fea, weight, bias, log_sigma)
    assert z.shape == (N, COUT, H, W)
    assert jnp.allclose(z, z_ref, atol=1e-3, rtol=1e-3)
    assert jnp.allclose(logdet, logdet_ref)

    print("KERNEL_OK")
</pallas_src>

<mosaic_0001>
module attributes {stable_mosaic.version = 11 : i64} {
  func.func @sigma_net_kernel(%arg0: i32, %arg1: memref<4x64x256xf32, #tpu.memory_space<vmem>>, %arg2: memref<4x3x256xf32, #tpu.memory_space<vmem>>, %arg3: memref<27x64xf32, #tpu.memory_space<vmem>>, %arg4: memref<9x256xf32, #tpu.memory_space<vmem>>, %arg5: memref<3x1xf32, #tpu.memory_space<vmem>>, %arg6: memref<1xf32, #tpu.memory_space<smem>>, %arg7: memref<4x3x256xf32, #tpu.memory_space<vmem>>) attributes {dimension_semantics = [#tpu.dimension_semantics<parallel>], iteration_bounds = array<i64: 2>, scalar_prefetch = 0 : i64, scratch_operands = 0 : i64, tpu.core_type = #tpu.core_type<tc>, window_params = [{transform_indices = @transform_0, window_bounds = array<i64: 4, 64, 256>}, {transform_indices = @transform_1, window_bounds = array<i64: 4, 3, 256>}, {pipeline_mode = #tpu.pipeline_mode<synchronous>, transform_indices = @transform_2, window_bounds = array<i64: 27, 64>}, {pipeline_mode = #tpu.pipeline_mode<synchronous>, transform_indices = @transform_3, window_bounds = array<i64: 9, 256>}, {pipeline_mode = #tpu.pipeline_mode<synchronous>, transform_indices = @transform_4, window_bounds = array<i64: 3, 1>}, {transform_indices = @transform_5, window_bounds = array<i64: 1>}, {transform_indices = @transform_6, window_bounds = array<i64: 4, 3, 256>}]} {
    %c0 = arith.constant 0 : index
    %c0_0 = arith.constant 0 : index
    %c0_1 = arith.constant 0 : index
    %0 = vector.load %arg1[%c0, %c0_0, %c0_1] : memref<4x64x256xf32, #tpu.memory_space<vmem>>, vector<4x64x256xf32>
    %c0_2 = arith.constant 0 : index
    %c0_3 = arith.constant 0 : index
    %1 = vector.load %arg3[%c0_2, %c0_3] : memref<27x64xf32, #tpu.memory_space<vmem>>, vector<27x64xf32>
    %2 = vector.shape_cast %1 : vector<27x64xf32> to vector<1x27x64xf32>
    %3 = vector.shape_cast %2 : vector<1x27x64xf32> to vector<1x27x64xf32>
    %4 = vector.broadcast %3 : vector<1x27x64xf32> to vector<4x27x64xf32>
    "tpu.trace_start"() <{level = 10 : i32, message = "bkc,bcp->bkp"}> : () -> ()
    %cst = arith.constant dense<0.000000e+00> : vector<4x27x256xf32>
    %5 = tpu.matmul %4, %0, %cst {dimension_numbers = #tpu.dot_dimension_numbers<[2], [1], [1], [2], [0, 0, 0, 1, 1, 2], [0], [0]>} : vector<4x27x64xf32>, vector<4x64x256xf32>, vector<4x27x256xf32> -> vector<4x27x256xf32>
    %cst_4 = arith.constant 0.000000e+00 : f32
    "tpu.trace_stop"() : () -> ()
    %6 = vector.broadcast %cst_4 : f32 to vector<4x3x256xf32>
    %7 = vector.extract_strided_slice %5 {offsets = [0, 0, 0], sizes = [4, 3, 256], strides = [1, 1, 1]} : vector<4x27x256xf32> to vector<4x3x256xf32>
    %8 = vector.extract_strided_slice %7 {offsets = [0, 0, 239], sizes = [4, 3, 17], strides = [1, 1, 1]} : vector<4x3x256xf32> to vector<4x3x17xf32>
    %9 = vector.extract_strided_slice %7 {offsets = [0, 0, 0], sizes = [4, 3, 239], strides = [1, 1, 1]} : vector<4x3x256xf32> to vector<4x3x239xf32>
    %10 = tpu.concatenate %8, %9 in 2 : vector<4x3x17xf32>, vector<4x3x239xf32> -> vector<4x3x256xf32>
    %c0_5 = arith.constant 0 : index
    %c0_6 = arith.constant 0 : index
    %11 = vector.load %arg4[%c0_5, %c0_6] : memref<9x256xf32, #tpu.memory_space<vmem>>, vector<1x256xf32>
    %12 = vector.shape_cast %11 : vector<1x256xf32> to vector<1x1x256xf32>
    %13 = vector.broadcast %12 : vector<1x1x256xf32> to vector<4x3x256xf32>
    %14 = arith.mulf %10, %13 : vector<4x3x256xf32>
    %15 = arith.addf %6, %14 : vector<4x3x256xf32>
    %16 = vector.extract_strided_slice %5 {offsets = [0, 3, 0], sizes = [4, 3, 256], strides = [1, 1, 1]} : vector<4x27x256xf32> to vector<4x3x256xf32>
    %17 = vector.extract_strided_slice %16 {offsets = [0, 0, 240], sizes = [4, 3, 16], strides = [1, 1, 1]} : vector<4x3x256xf32> to vector<4x3x16xf32>
    %18 = vector.extract_strided_slice %16 {offsets = [0, 0, 0], sizes = [4, 3, 240], strides = [1, 1, 1]} : vector<4x3x256xf32> to vector<4x3x240xf32>
    %19 = tpu.concatenate %17, %18 in 2 : vector<4x3x16xf32>, vector<4x3x240xf32> -> vector<4x3x256xf32>
    %c1 = arith.constant 1 : index
    %c0_7 = arith.constant 0 : index
    %20 = vector.load %arg4[%c1, %c0_7] : memref<9x256xf32, #tpu.memory_space<vmem>>, vector<1x256xf32>
    %21 = vector.shape_cast %20 : vector<1x256xf32> to vector<1x1x256xf32>
    %22 = vector.broadcast %21 : vector<1x1x256xf32> to vector<4x3x256xf32>
    %23 = arith.mulf %19, %22 : vector<4x3x256xf32>
    %24 = arith.addf %15, %23 : vector<4x3x256xf32>
    %25 = vector.extract_strided_slice %5 {offsets = [0, 6, 0], sizes = [4, 3, 256], strides = [1, 1, 1]} : vector<4x27x256xf32> to vector<4x3x256xf32>
    %26 = vector.extract_strided_slice %25 {offsets = [0, 0, 241], sizes = [4, 3, 15], strides = [1, 1, 1]} : vector<4x3x256xf32> to vector<4x3x15xf32>
    %27 = vector.extract_strided_slice %25 {offsets = [0, 0, 0], sizes = [4, 3, 241], strides = [1, 1, 1]} : vector<4x3x256xf32> to vector<4x3x241xf32>
    %28 = tpu.concatenate %26, %27 in 2 : vector<4x3x15xf32>, vector<4x3x241xf32> -> vector<4x3x256xf32>
    %c2 = arith.constant 2 : index
    %c0_8 = arith.constant 0 : index
    %29 = vector.load %arg4[%c2, %c0_8] : memref<9x256xf32, #tpu.memory_space<vmem>>, vector<1x256xf32>
    %30 = vector.shape_cast %29 : vector<1x256xf32> to vector<1x1x256xf32>
    %31 = vector.broadcast %30 : vector<1x1x256xf32> to vector<4x3x256xf32>
    %32 = arith.mulf %28, %31 : vector<4x3x256xf32>
    %33 = arith.addf %24, %32 : vector<4x3x256xf32>
    %34 = vector.extract_strided_slice %5 {offsets = [0, 9, 0], sizes = [4, 3, 256], strides = [1, 1, 1]} : vector<4x27x256xf32> to vector<4x3x256xf32>
    %35 = vector.extract_strided_slice %34 {offsets = [0, 0, 255], sizes = [4, 3, 1], strides = [1, 1, 1]} : vector<4x3x256xf32> to vector<4x3x1xf32>
    %36 = vector.extract_strided_slice %34 {offsets = [0, 0, 0], sizes = [4, 3, 255], strides = [1, 1, 1]} : vector<4x3x256xf32> to vector<4x3x255xf32>
    %37 = tpu.concatenate %35, %36 in 2 : vector<4x3x1xf32>, vector<4x3x255xf32> -> vector<4x3x256xf32>
    %c3 = arith.constant 3 : index
    %c0_9 = arith.constant 0 : index
    %38 = vector.load %arg4[%c3, %c0_9] : memref<9x256xf32, #tpu.memory_space<vmem>>, vector<1x256xf32>
    %39 = vector.shape_cast %38 : vector<1x256xf32> to vector<1x1x256xf32>
    %40 = vector.broadcast %39 : vector<1x1x256xf32> to vector<4x3x256xf32>
    %41 = arith.mulf %37, %40 : vector<4x3x256xf32>
    %42 = arith.addf %33, %41 : vector<4x3x256xf32>
    %43 = vector.extract_strided_slice %5 {offsets = [0, 12, 0], sizes = [4, 3, 256], strides = [1, 1, 1]} : vector<4x27x256xf32> to vector<4x3x256xf32>
    %44 = arith.addf %42, %43 : vector<4x3x256xf32>
    %45 = vector.extract_strided_slice %5 {offsets = [0, 15, 0], sizes = [4, 3, 256], strides = [1, 1, 1]} : vector<4x27x256xf32> to vector<4x3x256xf32>
    %46 = vector.extract_strided_slice %45 {offsets = [0, 0, 1], sizes = [4, 3, 255], strides = [1, 1, 1]} : vector<4x3x256xf32> to vector<4x3x255xf32>
    %47 = vector.extract_strided_slice %45 {offsets = [0, 0, 0], sizes = [4, 3, 1], strides = [1, 1, 1]} : vector<4x3x256xf32> to vector<4x3x1xf32>
    %48 = tpu.concatenate %46, %47 in 2 : vector<4x3x255xf32>, vector<4x3x1xf32> -> vector<4x3x256xf32>
    %c5 = arith.constant 5 : index
    %c0_10 = arith.constant 0 : index
    %49 = vector.load %arg4[%c5, %c0_10] : memref<9x256xf32, #tpu.memory_space<vmem>>, vector<1x256xf32>
    %50 = vector.shape_cast %49 : vector<1x256xf32> to vector<1x1x256xf32>
    %51 = vector.broadcast %50 : vector<1x1x256xf32> to vector<4x3x256xf32>
    %52 = arith.mulf %48, %51 : vector<4x3x256xf32>
    %53 = arith.addf %44, %52 : vector<4x3x256xf32>
    %54 = vector.extract_strided_slice %5 {offsets = [0, 18, 0], sizes = [4, 3, 256], strides = [1, 1, 1]} : vector<4x27x256xf32> to vector<4x3x256xf32>
    %55 = vector.extract_strided_slice %54 {offsets = [0, 0, 15], sizes = [4, 3, 241], strides = [1, 1, 1]} : vector<4x3x256xf32> to vector<4x3x241xf32>
    %56 = vector.extract_strided_slice %54 {offsets = [0, 0, 0], sizes = [4, 3, 15], strides = [1, 1, 1]} : vector<4x3x256xf32> to vector<4x3x15xf32>
    %57 = tpu.concatenate %55, %56 in 2 : vector<4x3x241xf32>, vector<4x3x15xf32> -> vector<4x3x256xf32>
    %c6 = arith.constant 6 : index
    %c0_11 = arith.constant 0 : index
    %58 = vector.load %arg4[%c6, %c0_11] : memref<9x256xf32, #tpu.memory_space<vmem>>, vector<1x256xf32>
    %59 = vector.shape_cast %58 : vector<1x256xf32> to vector<1x1x256xf32>
    %60 = vector.broadcast %59 : vector<1x1x256xf32> to vector<4x3x256xf32>
    %61 = arith.mulf %57, %60 : vector<4x3x256xf32>
    %62 = arith.addf %53, %61 : vector<4x3x256xf32>
    %63 = vector.extract_strided_slice %5 {offsets = [0, 21, 0], sizes = [4, 3, 256], strides = [1, 1, 1]} : vector<4x27x256xf32> to vector<4x3x256xf32>
    %64 = vector.extract_strided_slice %63 {offsets = [0, 0, 16], sizes = [4, 3, 240], strides = [1, 1, 1]} : vector<4x3x256xf32> to vector<4x3x240xf32>
    %65 = vector.extract_strided_slice %63 {offsets = [0, 0, 0], sizes = [4, 3, 16], strides = [1, 1, 1]} : vector<4x3x256xf32> to vector<4x3x16xf32>
    %66 = tpu.concatenate %64, %65 in 2 : vector<4x3x240xf32>, vector<4x3x16xf32> -> vector<4x3x256xf32>
    %c7 = arith.constant 7 : index
    %c0_12 = arith.constant 0 : index
    %67 = vector.load %arg4[%c7, %c0_12] : memref<9x256xf32, #tpu.memory_space<vmem>>, vector<1x256xf32>
    %68 = vector.shape_cast %67 : vector<1x256xf32> to vector<1x1x256xf32>
    %69 = vector.broadcast %68 : vector<1x1x256xf32> to vector<4x3x256xf32>
    %70 = arith.mulf %66, %69 : vector<4x3x256xf32>
    %71 = arith.addf %62, %70 : vector<4x3x256xf32>
    %72 = vector.extract_strided_slice %5 {offsets = [0, 24, 0], sizes = [4, 3, 256], strides = [1, 1, 1]} : vector<4x27x256xf32> to vector<4x3x256xf32>
    %73 = vector.extract_strided_slice %72 {offsets = [0, 0, 17], sizes = [4, 3, 239], strides = [1, 1, 1]} : vector<4x3x256xf32> to vector<4x3x239xf32>
    %74 = vector.extract_strided_slice %72 {offsets = [0, 0, 0], sizes = [4, 3, 17], strides = [1, 1, 1]} : vector<4x3x256xf32> to vector<4x3x17xf32>
    %75 = tpu.concatenate %73, %74 in 2 : vector<4x3x239xf32>, vector<4x3x17xf32> -> vector<4x3x256xf32>
    %c8 = arith.constant 8 : index
    %c0_13 = arith.constant 0 : index
    %76 = vector.load %arg4[%c8, %c0_13] : memref<9x256xf32, #tpu.memory_space<vmem>>, vector<1x256xf32>
    %77 = vector.shape_cast %76 : vector<1x256xf32> to vector<1x1x256xf32>
    %78 = vector.broadcast %77 : vector<1x1x256xf32> to vector<4x3x256xf32>
    %79 = arith.mulf %75, %78 : vector<4x3x256xf32>
    %80 = arith.addf %71, %79 : vector<4x3x256xf32>
    %c0_14 = arith.constant 0 : index
    %c0_15 = arith.constant 0 : index
    %81 = vector.load %arg5[%c0_14, %c0_15] : memref<3x1xf32, #tpu.memory_space<vmem>>, vector<3x1xf32>
    %82 = vector.shape_cast %81 : vector<3x1xf32> to vector<1x3x1xf32>
    %83 = vector.broadcast %82 : vector<1x3x1xf32> to vector<4x3x256xf32>
    %84 = arith.addf %80, %83 : vector<4x3x256xf32>
    %c0_16 = arith.constant 0 : index
    %85 = memref.load %arg6[%c0_16] : memref<1xf32, #tpu.memory_space<smem>>
    %c0_17 = arith.constant 0 : index
    %c0_18 = arith.constant 0 : index
    %c0_19 = arith.constant 0 : index
    %86 = vector.load %arg2[%c0_17, %c0_18, %c0_19] : memref<4x3x256xf32, #tpu.memory_space<vmem>>, vector<4x3x256xf32>
    %87 = arith.subf %86, %84 : vector<4x3x256xf32>
    %88 = vector.broadcast %85 : f32 to vector<4x3x256xf32>
    %89 = arith.mulf %87, %88 : vector<4x3x256xf32>
    %c0_20 = arith.constant 0 : index
    %c0_21 = arith.constant 0 : index
    %c0_22 = arith.constant 0 : index
    %90 = vector.load %arg7[%c0_20, %c0_21, %c0_22] : memref<4x3x256xf32, #tpu.memory_space<vmem>>, vector<4x3x256xf32>
    tpu.vector_store %arg7[%c0_20, %c0_21, %c0_22], %89 {strides = array<i32>} : memref<4x3x256xf32, #tpu.memory_space<vmem>>, vector<4x3x256xf32>,
    return
  }
  func.func @transform_0(%arg0: i32) -> (i32, i32, i32) {
    %c0_i32 = arith.constant 0 : i32
    %c0_i32_0 = arith.constant 0 : i32
    %c0_i32_1 = arith.constant 0 : i32
    return %arg0, %c0_i32, %c0_i32_0 : i32, i32, i32
  }
  func.func @transform_1(%arg0: i32) -> (i32, i32, i32) {
    %c0_i32 = arith.constant 0 : i32
    %c0_i32_0 = arith.constant 0 : i32
    %c0_i32_1 = arith.constant 0 : i32
    return %arg0, %c0_i32, %c0_i32_0 : i32, i32, i32
  }
  func.func @transform_2(%arg0: i32) -> (i32, i32) {
    %c0_i32 = arith.constant 0 : i32
    %c0_i32_0 = arith.constant 0 : i32
    %c0_i32_1 = arith.constant 0 : i32
    return %c0_i32, %c0_i32_0 : i32, i32
  }
  func.func @transform_3(%arg0: i32) -> (i32, i32) {
    %c0_i32 = arith.constant 0 : i32
    %c0_i32_0 = arith.constant 0 : i32
    %c0_i32_1 = arith.constant 0 : i32
    return %c0_i32, %c0_i32_0 : i32, i32
  }
  func.func @transform_4(%arg0: i32) -> (i32, i32) {
    %c0_i32 = arith.constant 0 : i32
    %c0_i32_0 = arith.constant 0 : i32
    %c0_i32_1 = arith.constant 0 : i32
    return %c0_i32, %c0_i32_0 : i32, i32
  }
  func.func @transform_5(%arg0: i32) -> i32 {
    %c0_i32 = arith.constant 0 : i32
    %c0_i32_0 = arith.constant 0 : i32
    return %c0_i32 : i32
  }
  func.func @transform_6(%arg0: i32) -> (i32, i32, i32) {
    %c0_i32 = arith.constant 0 : i32
    %c0_i32_0 = arith.constant 0 : i32
    %c0_i32_1 = arith.constant 0 : i32
    return %arg0, %c0_i32, %c0_i32_0 : i32, i32, i32
  }
}

</mosaic_0001>

<llo_original>
// kernel: tpu_custom_call.1
$region0: #{tpu_custom_call.1}
  #allocation0 [shape = 'u32[]', space=smem, size = 0x4, offset = 0x4, fixed_abs, tag = 'smem constant byte address 0x4 - core index']
  #allocation1 [shape = 'u32[144,128]{1,0:T(1,128)}', space=vmem, size = 0x12000, scoped, tag = 'internal scratch']
  #allocation2 [shape = 'f32[1]{0:T(128)S(6)}', space=smem, size = 0x200, scoped, tag = 'scoped memory for tpu_custom_call.1']
  %s0 = inlined_call_operand.hbm [shape: f32[8,64,256], index: 0, kind: input, shape index: {}]
  %s1 = inlined_call_operand.vmem [shape: f32[8,3,256], index: 1, kind: input, shape index: {}]
  %s2 = inlined_call_operand.vmem [shape: f32[27,64], index: 2, kind: input, shape index: {}]
  %s3 = inlined_call_operand.vmem [shape: f32[9,256], index: 3, kind: input, shape index: {}]
  %s4 = inlined_call_operand.vmem [shape: f32[3,1], index: 4, kind: input, shape index: {}]
  %s5 = inlined_call_operand.<no memory space> [shape: f32[1], index: 5, kind: input, shape index: {}]
  %s6 = inlined_call_operand.vmem [shape: f32[8,3,256], index: 6, kind: output, shape index: {}]
  %s7 = sld [smem:[#allocation0]]
  $region61: #{tpu_custom_call.1} parent=0
    _
  %s9 = ssub.s32 1, %s7
  %s10 = scalar_select 0, %s9, %s7
  %11 = sst [smem:[#allocation2]] %s5
  $region1: #{tpu_custom_call.1} parent=0
    #allocation3 [shape = 'u8[524288]{0}', space=vmem, size = 0x80000, scoped, tag = 'input window, operand 0']
    #allocation4 [shape = 's32[2]{0}', space=sflag, size = 0x8, scoped, tag = 'scoped memory for tpu_custom_call.1']
    %12 = vsyncpa [#allocation4], 0
    %s13 = scalar_lea.sflag [#allocation4], 1
    %14 = vsyncpa %s13, 0
    loop: start=0, step=1, limit=4
    $region2: #{tpu_custom_call.1} parent=1 // loop_pre_header
      _
    $region3: #{tpu_custom_call.1} parent=1 // loop_header
      %s16 = sphi 0, %s20
      %p17 = scmp.ge.s32.totalorder %s16, 4
      %s26 = sphi 0, %s28
      %s29 = sphi 0, %s26
      %s30 = sphi 0, %s29
      %s46 = sphi 0, %s30
      %s52 = sphi 0, %s54
      %s55 = sphi 0, %s52
      %s56 = sphi 0, %s55
      %s72 = sphi 0, %s56
      %s76 = sphi 0, %s76
      %s78 = sphi 0, %s76
      %s79 = sphi 0, %s78
      %s93 = sphi 0, %s79
      %s97 = sphi 0, %s97
      %s99 = sphi 0, %s97
      %s100 = sphi 0, %s99
      %s114 = sphi 0, %s100
      %s118 = sphi 0, %s118
      %s120 = sphi 0, %s118
      %s121 = sphi 0, %s120
      %s135 = sphi 0, %s121
      %s139 = sphi 0, %s139
      %s141 = sphi 0, %s139
      %s142 = sphi 0, %s141
      %s156 = sphi 0, %s142
      %s162 = sphi 0, %s164
      %s165 = sphi 0, %s162
      %s166 = sphi 0, %s165
      %s182 = sphi 0, %s166
    $region4: #{tpu_custom_call.1} parent=1 // loop_header_branch
      %19 = sbr.rel (%p17) target = $region8
    $region5: #{tpu_custom_call.1} parent=1 // loop_body
      %s21 = ssub.s32 %s16, 1
      %s22 = ssub.s32 %s16, 2
      %s23 = sadd.s32 %s16, 1
      %s24 = ssub.s32 %s16, %s23
      %p25 = scmp.eq.s32.totalorder %s24, 0
      %s27 = sadd.s32 %s26, 1
      %s28 = scalar_select %p25, %s26, %s27
      %p31 = pneg %p25
      %p32 = scmp.eq.s32.totalorder %s16, 1
      %p33 = por %p31, %p32
      %p34 = scmp.ne.s32.totalorder %s26, %s29
      %p35 = scmp.eq.s32.totalorder %s16, 0
      %p36 = por %p34, %p35
      %p37 = scmp.ne.s32.totalorder %s26, %s29
      %p38 = scmp.eq.s32.totalorder %s21, 1
      %p39 = por %p37, %p38
      %p40 = scmp.ne.s32.totalorder %s29, %s30
      %p41 = scmp.eq.s32.totalorder %s21, 0
      %p42 = por %p40, %p41
      %p43 = scmp.ne.s32.totalorder %s29, %s30
      %p44 = scmp.eq.s32.totalorder %s22, 1
      %p45 = por %p43, %p44
      %p47 = scmp.ne.s32.totalorder %s30, %s46
      %p48 = scmp.eq.s32.totalorder %s22, 0
      %p49 = por %p47, %p48
      %s50 = ssub.s32 %s16, %s23
      %p51 = scmp.eq.s32.totalorder %s50, 0
      %s53 = sadd.s32 %s52, 1
      %s54 = scalar_select %p51, %s52, %s53
      %p57 = pneg %p51
      %p58 = scmp.eq.s32.totalorder %s16, 1
      %p59 = por %p57, %p58
      %p60 = scmp.ne.s32.totalorder %s52, %s55
      %p61 = scmp.eq.s32.totalorder %s16, 0
      %p62 = por %p60, %p61
      %p63 = scmp.ne.s32.totalorder %s52, %s55
      %p64 = scmp.eq.s32.totalorder %s21, 1
      %p65 = por %p63, %p64
      %p66 = scmp.ne.s32.totalorder %s55, %s56
      %p67 = scmp.eq.s32.totalorder %s21, 0
      %p68 = por %p66, %p67
      %p69 = scmp.ne.s32.totalorder %s55, %s56
      %p70 = scmp.eq.s32.totalorder %s22, 1
      %p71 = por %p69, %p70
      %p73 = scmp.ne.s32.totalorder %s56, %s72
      %p74 = scmp.eq.s32.totalorder %s22, 0
      %p75 = por %p73, %p74
      %s77 = sadd.s32 %s76, 1
      %p80 = scmp.eq.s32.totalorder %s16, 1
      %p81 = scmp.ne.s32.totalorder %s76, %s78
      %p82 = scmp.eq.s32.totalorder %s16, 0
      %p83 = por %p81, %p82
      %p84 = scmp.ne.s32.totalorder %s76, %s78
      %p85 = scmp.eq.s32.totalorder %s21, 1
      %p86 = por %p84, %p85
      %p87 = scmp.ne.s32.totalorder %s78, %s79
      %p88 = scmp.eq.s32.totalorder %s21, 0
      %p89 = por %p87, %p88
      %p90 = scmp.ne.s32.totalorder %s78, %s79
      %p91 = scmp.eq.s32.totalorder %s22, 1
      %p92 = por %p90, %p91
      %p94 = scmp.ne.s32.totalorder %s79, %s93
      %p95 = scmp.eq.s32.totalorder %s22, 0
      %p96 = por %p94, %p95
      %s98 = sadd.s32 %s97, 1
      %p101 = scmp.eq.s32.totalorder %s16, 1
      %p102 = scmp.ne.s32.totalorder %s97, %s99
      %p103 = scmp.eq.s32.totalorder %s16, 0
      %p104 = por %p102, %p103
      %p105 = scmp.ne.s32.totalorder %s97, %s99
      %p106 = scmp.eq.s32.totalorder %s21, 1
      %p107 = por %p105, %p106
      %p108 = scmp.ne.s32.totalorder %s99, %s100
      %p109 = scmp.eq.s32.totalorder %s21, 0
      %p110 = por %p108, %p109
      %p111 = scmp.ne.s32.totalorder %s99, %s100
      %p112 = scmp.eq.s32.totalorder %s22, 1
      %p113 = por %p111, %p112
      %p115 = scmp.ne.s32.totalorder %s100, %s114
      %p116 = scmp.eq.s32.totalorder %s22, 0
      %p117 = por %p115, %p116
      %s119 = sadd.s32 %s118, 1
      %p122 = scmp.eq.s32.totalorder %s16, 1
      %p123 = scmp.ne.s32.totalorder %s118, %s120
      %p124 = scmp.eq.s32.totalorder %s16, 0
      %p125 = por %p123, %p124
      %p126 = scmp.ne.s32.totalorder %s118, %s120
      %p127 = scmp.eq.s32.totalorder %s21, 1
      %p128 = por %p126, %p127
      %p129 = scmp.ne.s32.totalorder %s120, %s121
      %p130 = scmp.eq.s32.totalorder %s21, 0
      %p131 = por %p129, %p130
      %p132 = scmp.ne.s32.totalorder %s120, %s121
      %p133 = scmp.eq.s32.totalorder %s22, 1
      %p134 = por %p132, %p133
      %p136 = scmp.ne.s32.totalorder %s121, %s135
      %p137 = scmp.eq.s32.totalorder %s22, 0
      %p138 = por %p136, %p137
      %s140 = sadd.s32 %s139, 1
      %p143 = scmp.eq.s32.totalorder %s16, 1
      %p144 = scmp.ne.s32.totalorder %s139, %s141
      %p145 = scmp.eq.s32.totalorder %s16, 0
      %p146 = por %p144, %p145
      %p147 = scmp.ne.s32.totalorder %s139, %s141
      %p148 = scmp.eq.s32.totalorder %s21, 1
      %p149 = por %p147, %p148
      %p150 = scmp.ne.s32.totalorder %s141, %s142
      %p151 = scmp.eq.s32.totalorder %s21, 0
      %p152 = por %p150, %p151
      %p153 = scmp.ne.s32.totalorder %s141, %s142
      %p154 = scmp.eq.s32.totalorder %s22, 1
      %p155 = por %p153, %p154
      %p157 = scmp.ne.s32.totalorder %s142, %s156
      %p158 = scmp.eq.s32.totalorder %s22, 0
      %p159 = por %p157, %p158
      %s160 = ssub.s32 %s16, %s23
      %p161 = scmp.eq.s32.totalorder %s160, 0
      %s163 = sadd.s32 %s162, 1
      %s164 = scalar_select %p161, %s162, %s163
      %p167 = pneg %p161
      %p168 = scmp.eq.s32.totalorder %s16, 1
      %p169 = por %p167, %p168
      %p170 = scmp.ne.s32.totalorder %s162, %s165
      %p171 = scmp.eq.s32.totalorder %s16, 0
      %p172 = por %p170, %p171
      %p173 = scmp.ne.s32.totalorder %s162, %s165
      %p174 = scmp.eq.s32.totalorder %s21, 1
      %p175 = por %p173, %p174
      %p176 = scmp.ne.s32.totalorder %s165, %s166
      %p177 = scmp.eq.s32.totalorder %s21, 0
      %p178 = por %p176, %p177
      %p179 = scmp.ne.s32.totalorder %s165, %s166
      %p180 = scmp.eq.s32.totalorder %s22, 1
      %p181 = por %p179, %p180
      %p183 = scmp.ne.s32.totalorder %s166, %s182
      %p184 = scmp.eq.s32.totalorder %s22, 0
      %p185 = por %p183, %p184
      %p186 = scmp.le.s32.totalorder 1, %s16
      %p187 = scmp.lt.s32.totalorder %s16, 3
      %p188 = pnand %p186, %p187
      %p189 = pneg %p188
      // Predicated region
      $region9: #{tpu_custom_call.1} parent=5 // pred_check
        _
      $region10: #{tpu_custom_call.1} parent=5 // pred_check_branch
        %191 = sbr.rel (%p188) target = $region12
      $region11: #{tpu_custom_call.1} parent=5 // pred_region
        %s192 = ssub.s32 %s16, 1
        // Predicated region
        $region13: #{tpu_custom_call.1} parent=11 // pred_check
          %p193 = pneg %p89
        $region14: #{tpu_custom_call.1} parent=11 // pred_check_branch
          %195 = sbr.rel (%p193) target = $region16
        $region15: #{tpu_custom_call.1} parent=11 // pred_region
          _
        $region16: #{tpu_custom_call.1} parent=11 // pred_fallthru
          _
        // Predicated region
        $region17: #{tpu_custom_call.1} parent=11 // pred_check
          %p196 = pneg %p110
        $region18: #{tpu_custom_call.1} parent=11 // pred_check_branch
          %198 = sbr.rel (%p196) target = $region20
        $region19: #{tpu_custom_call.1} parent=11 // pred_region
          _
        $region20: #{tpu_custom_call.1} parent=11 // pred_fallthru
          _
        // Predicated region
        $region21: #{tpu_custom_call.1} parent=11 // pred_check
          %p199 = pneg %p131
        $region22: #{tpu_custom_call.1} parent=11 // pred_check_branch
          %201 = sbr.rel (%p199) target = $region24
        $region23: #{tpu_custom_call.1} parent=11 // pred_region
          _
        $region24: #{tpu_custom_call.1} parent=11 // pred_fallthru
          _
        // Predicated region
        $region25: #{tpu_custom_call.1} parent=11 // pred_check
          %p202 = pneg %p152
        $region26: #{tpu_custom_call.1} parent=11 // pred_check_branch
          %204 = sbr.rel (%p202) target = $region28
        $region27: #{tpu_custom_call.1} parent=11 // pred_region
          _
        $region28: #{tpu_custom_call.1} parent=11 // pred_fallthru
          _
      $region12: #{tpu_custom_call.1} parent=5 // pred_fallthru
        _
      %p205 = scmp.lt.s32.totalorder %s16, 2
      // Predicated region
      $region29: #{tpu_custom_call.1} parent=5 // pred_check
        %p206 = pneg %p205
      $region30: #{tpu_custom_call.1} parent=5 // pred_check_branch
        %208 = sbr.rel (%p206) target = $region32
      $region31: #{tpu_custom_call.1} parent=5 // pred_region
        // Predicated region
        $region33: #{tpu_custom_call.1} parent=31 // pred_check
          %p209 = pneg %p36
        $region34: #{tpu_custom_call.1} parent=31 // pred_check_branch
          %211 = sbr.rel (%p209) target = $region36
        $region35: #{tpu_custom_call.1} parent=31 // pred_region
          %s212 = sand.u32 %s26, 1
          %s213 = scalar_lea.sflag [#allocation4], %s212
          %s214 = sand.u32 %s26, 1
          %s215 = smul.addr %s214, 512
          %s216 = scalar_lea.vmem [#allocation3], %s215
          %s217 = smul.u32 4, %s16
          %s219 = ssub.s32 8192, 8192
          %220 = vsyncadd %s213, %s219
          %s221 = smul.addr %s217, 16
          %s222 = smul.addr %s221, 128
          %s223 = scalar_lea.hbm %s0, %s222
          %s224 = sshll.u32 %s216, 4
          %s225 = int_to_ptr.vmem [resolvable:$true] %s224
          %230 = dma.hbm_to_vmem [thread:$0]  %s223, 8192, %s225, %s213, 256, 256, 16
        $region36: #{tpu_custom_call.1} parent=31 // pred_fallthru
          _
        // Predicated region
        $region37: #{tpu_custom_call.1} parent=31 // pred_check
          %p231 = pneg %p62
        $region38: #{tpu_custom_call.1} parent=31 // pred_check_branch
          %233 = sbr.rel (%p231) target = $region40
        $region39: #{tpu_custom_call.1} parent=31 // pred_region
          %s234 = smul.u32 4, %s16
          %p235 = scmp.lt.s32.totalorder %s234, 7
          %s236 = scalar_select %p235, %s234, 7
          %s237 = smul.addr %s236, 2
          %s238 = smul.addr %s237, 4
          %s239 = scalar_lea.vmem %s1, %s238
          %s240 = smul.u32 4, %s16
        $region40: #{tpu_custom_call.1} parent=31 // pred_fallthru
          _
      $region32: #{tpu_custom_call.1} parent=5 // pred_fallthru
        _
      %p241 = scmp.le.s32.totalorder 1, %s16
      %p242 = scmp.lt.s32.totalorder %s16, 3
      %p243 = pnand %p241, %p242
      %p244 = pneg %p243
      // Predicated region
      $region41: #{tpu_custom_call.1} parent=5 // pred_check
        _
      $region42: #{tpu_custom_call.1} parent=5 // pred_check_branch
        %246 = sbr.rel (%p243) target = $region44
      $region43: #{tpu_custom_call.1} parent=5 // pred_region
        %s247 = ssub.s32 %s16, 1
        %s248 = sand.u32 %s29, 1
        %s249 = scalar_lea.sflag [#allocation4], %s248
        %s250 = sand.u32 %s29, 1
        %s251 = smul.addr %s250, 512
        %s252 = scalar_lea.vmem [#allocation3], %s251
        // Predicated region
        $region45: #{tpu_custom_call.1} parent=43 // pred_check
          %p253 = pneg %p42
        $region46: #{tpu_custom_call.1} parent=43 // pred_check_branch
          %255 = sbr.rel (%p253) target = $region48
        $region47: #{tpu_custom_call.1} parent=43 // pred_region
          %256 = dma.done %s249, 8192
        $region48: #{tpu_custom_call.1} parent=43 // pred_fallthru
          _
        %s257 = sand.u32 %s29, 1
        %s258 = scalar_lea.sflag [#allocation4], %s257
        %s259 = sand.u32 %s29, 1
        %s260 = smul.addr %s259, 512
        %s261 = scalar_lea.vmem [#allocation3], %s260
        %p262 = pneg %p42
        %p263 = pneg %p39
        %s264 = smul.u32 4, %s21
        %p265 = scmp.lt.s32.totalorder %s264, 7
        %s266 = scalar_select %p265, %s264, 7
        %s267 = smul.addr %s266, 2
        %s268 = smul.addr %s267, 4
        %s269 = scalar_lea.vmem %s1, %s268
        %p270 = pneg %p68
        %p271 = pneg %p65
        %p272 = pneg %p89
        %p273 = pneg %p86
        %p274 = pneg %p110
        %p275 = pneg %p107
        %p276 = pneg %p131
        %p277 = pneg %p128
        %p278 = pneg %p152
        %p279 = pneg %p149
        %p280 = pneg %p178
        %p281 = pneg %p175
        %s282 = smul.u32 4, %s21
        %p283 = scmp.lt.s32.totalorder %s282, 7
        %s284 = scalar_select %p283, %s282, 7
        %s285 = smul.addr %s284, 2
        %s286 = smul.addr %s285, 4
        %s287 = scalar_lea.vmem %s6, %s286
        %s288 = smul.u32 4, %s21
        %s289 = smul.u32 4, %s21
        %p290 = scmp.lt.s32.totalorder %s289, 7
        %s291 = scalar_select %p290, %s289, 7
        %s292 = smul.addr %s291, 2
        %s293 = smul.addr %s292, 4
        %s294 = scalar_lea.vmem %s1, %s293
        %s295 = smul.u32 4, %s21
        %s296 = smul.u32 4, %s21
        %p297 = scmp.lt.s32.totalorder %s296, 7
        %s298 = scalar_select %p297, %s296, 7
        %s299 = smul.addr %s298, 2
        %s300 = smul.addr %s299, 4
        %s301 = scalar_lea.vmem %s6, %s300
        %s302 = smul.u32 4, %s21
        %v303 = vld [vmem:[%s252] sm:$0xff]
        %v304 = vld [vmem:[%s252 + $0x8] sm:$0xff]
        %v305 = vld [vmem:[%s252 + $0x10] sm:$0xff]
        %v306 = vld [vmem:[%s252 + $0x18] sm:$0xff]
        %v307 = vld [vmem:[%s252 + $0x20] sm:$0xff]
        %v308 = vld [vmem:[%s252 + $0x28] sm:$0xff]
        %v309 = vld [vmem:[%s252 + $0x30] sm:$0xff]
        %v310 = vld [vmem:[%s252 + $0x38] sm:$0xff]
        %v311 = vld [vmem:[%s252 + $0x40] sm:$0xff]
        %v312 = vld [vmem:[%s252 + $0x48] sm:$0xff]
        %v313 = vld [vmem:[%s252 + $0x50] sm:$0xff]
        %v314 = vld [vmem:[%s252 + $0x58] sm:$0xff]
        %v315 = vld [vmem:[%s252 + $0x60] sm:$0xff]
        %v316 = vld [vmem:[%s252 + $0x68] sm:$0xff]
        %v317 = vld [vmem:[%s252 + $0x70] sm:$0xff]
        %v318 = vld [vmem:[%s252 + $0x78] sm:$0xff]
        %v319 = vld [vmem:[%s252 + $0x80] sm:$0xff]
        %v320 = vld [vmem:[%s252 + $0x88] sm:$0xff]
        %v321 = vld [vmem:[%s252 + $0x90] sm:$0xff]
        %v322 = vld [vmem:[%s252 + $0x98] sm:$0xff]
        %v323 = vld [vmem:[%s252 + $0xa0] sm:$0xff]
        %v324 = vld [vmem:[%s252 + $0xa8] sm:$0xff]
        %v325 = vld [vmem:[%s252 + $0xb0] sm:$0xff]
        %v326 = vld [vmem:[%s252 + $0xb8] sm:$0xff]
        %v327 = vld [vmem:[%s252 + $0xc0] sm:$0xff]
        %v328 = vld [vmem:[%s252 + $0xc8] sm:$0xff]
        %v329 = vld [vmem:[%s252 + $0xd0] sm:$0xff]
        %v330 = vld [vmem:[%s252 + $0xd8] sm:$0xff]
        %v331 = vld [vmem:[%s252 + $0xe0] sm:$0xff]
        %v332 = vld [vmem:[%s252 + $0xe8] sm:$0xff]
        %v333 = vld [vmem:[%s252 + $0xf0] sm:$0xff]
        %v334 = vld [vmem:[%s252 + $0xf8] sm:$0xff]
        %v335 = vld [vmem:[%s252 + $0x100] sm:$0xff]
        %v336 = vld [vmem:[%s252 + $0x108] sm:$0xff]
        %v337 = vld [vmem:[%s252 + $0x110] sm:$0xff]
        %v338 = vld [vmem:[%s252 + $0x118] sm:$0xff]
        %v339 = vld [vmem:[%s252 + $0x120] sm:$0xff]
        %v340 = vld [vmem:[%s252 + $0x128] sm:$0xff]
        %v341 = vld [vmem:[%s252 + $0x130] sm:$0xff]
        %v342 = vld [vmem:[%s252 + $0x138] sm:$0xff]
        %v343 = vld [vmem:[%s252 + $0x140] sm:$0xff]
        %v344 = vld [vmem:[%s252 + $0x148] sm:$0xff]
        %v345 = vld [vmem:[%s252 + $0x150] sm:$0xff]
        %v346 = vld [vmem:[%s252 + $0x158] sm:$0xff]
        %v347 = vld [vmem:[%s252 + $0x160] sm:$0xff]
        %v348 = vld [vmem:[%s252 + $0x168] sm:$0xff]
        %v349 = vld [vmem:[%s252 + $0x170] sm:$0xff]
        %v350 = vld [vmem:[%s252 + $0x178] sm:$0xff]
        %v351 = vld [vmem:[%s252 + $0x180] sm:$0xff]
        %v352 = vld [vmem:[%s252 + $0x188] sm:$0xff]
        %v353 = vld [vmem:[%s252 + $0x190] sm:$0xff]
        %v354 = vld [vmem:[%s252 + $0x198] sm:$0xff]
        %v355 = vld [vmem:[%s252 + $0x1a0] sm:$0xff]
        %v356 = vld [vmem:[%s252 + $0x1a8] sm:$0xff]
        %v357 = vld [vmem:[%s252 + $0x1b0] sm:$0xff]
        %v358 = vld [vmem:[%s252 + $0x1b8] sm:$0xff]
        %v359 = vld [vmem:[%s252 + $0x1c0] sm:$0xff]
        %v360 = vld [vmem:[%s252 + $0x1c8] sm:$0xff]
        %v361 = vld [vmem:[%s252 + $0x1d0] sm:$0xff]
        %v362 = vld [vmem:[%s252 + $0x1d8] sm:$0xff]
        %v363 = vld [vmem:[%s252 + $0x1e0] sm:$0xff]
        %v364 = vld [vmem:[%s252 + $0x1e8] sm:$0xff]
        %v365 = vld [vmem:[%s252 + $0x1f0] sm:$0xff]
        %v366 = vld [vmem:[%s252 + $0x1f8] sm:$0xff]
        %v367 = vld [vmem:[%s2] sm:$0xff]
        %v368 = vld [vmem:[%s2 + $0x8] sm:$0xff]
        %v369 = vld [vmem:[%s2 + $0x10] sm:$0xff]
        %v370 = vld [vmem:[%s2 + $0x18] sm:$0x7]
        %vm371 = vcmask 523264
        %v373 = vsel %vm371, %v367, 0
        %v376 = vsel %vm371, %v368, 0
        %v379 = vsel %vm371, %v369, 0
        %v382 = vsel %vm371, %v370, 0
        %384 = vmatprep.subr.mxu0 0.0
        %385 = vmatpush1.msra.mxu0 0.0
        %386 = vmatprep.subr.mxu0 0.0
        %387 = vmatpush1.msra.mxu0 0.0
        %388 = vmatprep.subr.mxu0 0.0
        %389 = vmatpush1.msra.mxu0 0.0
        %390 = vmatprep.subr.mxu0 0.0
        %391 = vmatpush1.msra.mxu0 0.0
        %392 = vmatprep.subr.mxu0 0.0
        %393 = vmatpush1.msra.mxu0 0.0
        %394 = vmatprep.subr.mxu0 0.0
        %395 = vmatpush1.msra.mxu0 0.0
        %396 = vmatprep.subr.mxu0 0.0
        %397 = vmatpush1.msra.mxu0 0.0
        %398 = vmatprep.subr.mxu0 0.0
        %399 = vmatpush1.msra.mxu0 0.0
        %400 = vmatprep.subr.mxu0 %v318
        %401 = vmatpush1.msra.mxu0 %v317
        %402 = vmatprep.subr.mxu0 %v316
        %403 = vmatpush1.msra.mxu0 %v315
        %404 = vmatprep.subr.mxu0 %v314
        %405 = vmatpush1.msra.mxu0 %v313
        %406 = vmatprep.subr.mxu0 %v312
        %407 = vmatpush1.msra.mxu0 %v311
        %408 = vmatprep.subr.mxu0 %v310
        %409 = vmatpush1.msra.mxu0 %v309
        %410 = vmatprep.subr.mxu0 %v308
        %411 = vmatpush1.msra.mxu0 %v307
        %412 = vmatprep.subr.mxu0 %v306
        %413 = vmatpush1.msra.mxu0 %v305
        %414 = vmatprep.subr.mxu0 %v304
        %415 = vmatpush1.msra.mxu0 %v303
        %416 = vmatprep.subr.mxu0 0.0
        %417 = vmatpush2.msra.mxu0 0.0
        %418 = vmatprep.subr.mxu0 0.0
        %419 = vmatpush2.msra.mxu0 0.0
        %420 = vmatprep.subr.mxu0 0.0
        %421 = vmatpush2.msra.mxu0 0.0
        %422 = vmatprep.subr.mxu0 0.0
        %423 = vmatpush2.msra.mxu0 0.0
        %424 = vmatprep.subr.mxu0 0.0
        %425 = vmatpush2.msra.mxu0 0.0
        %426 = vmatprep.subr.mxu0 0.0
        %427 = vmatpush2.msra.mxu0 0.0
        %428 = vmatprep.subr.mxu0 0.0
        %429 = vmatpush2.msra.mxu0 0.0
        %430 = vmatprep.subr.mxu0 0.0
        %431 = vmatpush2.msra.mxu0 0.0
        %432 = vmatprep.subr.mxu0 0.0
        %433 = vmatpush2.msra.mxu0 0.0
        %434 = vmatprep.subr.mxu0 0.0
        %435 = vmatpush2.msra.mxu0 0.0
        %436 = vmatprep.subr.mxu0 0.0
        %437 = vmatpush2.msra.mxu0 0.0
        %438 = vmatprep.subr.mxu0 0.0
        %439 = vmatpush2.msra.mxu0 0.0
        %440 = vmatprep.subr.mxu0 0.0
        %441 = vmatpush2.msra.mxu0 0.0
        %442 = vmatprep.subr.mxu0 0.0
        %443 = vmatpush2.msra.mxu0 0.0
        %444 = vmatprep.subr.mxu0 0.0
        %445 = vmatpush2.msra.mxu0 0.0
        %446 = vmatprep.subr.mxu0 0.0
        %447 = vmatpush2.msra.mxu0 0.0
        %448 = vmatprep.mubr.f32.mxu0 0.0
        %449 = vmatmul.mubr.f32.gmra.mxu0 %v373
        %v450 = vpop.f32.mrf.mxu0
        %v451 = vadd.f32 0.0, %v450
        %v452 = vpop.f32.mrf.mxu0
        %v453 = vadd.f32 0.0, %v452
        %454 = vmatprep.mubr.f32.mxu0 0.0
        %455 = vmatmul.mubr.f32.gmra.mxu0 %v376
        %v456 = vpop.f32.mrf.mxu0
        %v457 = vadd.f32 0.0, %v456
        %v458 = vpop.f32.mrf.mxu0
        %v459 = vadd.f32 0.0, %v458
        %460 = vmatprep.mubr.f32.mxu0 0.0
        %461 = vmatmul.mubr.f32.gmra.mxu0 %v379
        %v462 = vpop.f32.mrf.mxu0
        %v463 = vadd.f32 0.0, %v462
        %v464 = vpop.f32.mrf.mxu0
        %v465 = vadd.f32 0.0, %v464
        %466 = vmatprep.mubr.f32.mxu0 0.0
        %467 = vmatmul.mubr.f32.gmra.mxu0 %v382
        %v468 = vpop.f32.mrf.mxu0
        %v469 = vadd.f32 0.0, %v468
        %v470 = vpop.f32.mrf.mxu0
        %v471 = vadd.f32 0.0, %v470
        %472 = vdwg.mxu0
        %473 = vmatprep.subr.mxu0 0.0
        %474 = vmatpush1.msra.mxu0 0.0
        %475 = vmatprep.subr.mxu0 0.0
        %476 = vmatpush1.msra.mxu0 0.0
        %477 = vmatprep.subr.mxu0 0.0
        %478 = vmatpush1.msra.mxu0 0.0
        %479 = vmatprep.subr.mxu0 0.0
        %480 = vmatpush1.msra.mxu0 0.0
        %481 = vmatprep.subr.mxu0 0.0
        %482 = vmatpush1.msra.mxu0 0.0
        %483 = vmatprep.subr.mxu0 0.0
        %484 = vmatpush1.msra.mxu0 0.0
        %485 = vmatprep.subr.mxu0 0.0
        %486 = vmatpush1.msra.mxu0 0.0
        %487 = vmatprep.subr.mxu0 0.0
        %488 = vmatpush1.msra.mxu0 0.0
        %489 = vmatprep.subr.mxu0 %v334
        %490 = vmatpush1.msra.mxu0 %v333
        %491 = vmatprep.subr.mxu0 %v332
        %492 = vmatpush1.msra.mxu0 %v331
        %493 = vmatprep.subr.mxu0 %v330
        %494 = vmatpush1.msra.mxu0 %v329
        %495 = vmatprep.subr.mxu0 %v328
        %496 = vmatpush1.msra.mxu0 %v327
        %497 = vmatprep.subr.mxu0 %v326
        %498 = vmatpush1.msra.mxu0 %v325
        %499 = vmatprep.subr.mxu0 %v324
        %500 = vmatpush1.msra.mxu0 %v323
        %501 = vmatprep.subr.mxu0 %v322
        %502 = vmatpush1.msra.mxu0 %v321
        %503 = vmatprep.subr.mxu0 %v320
        %504 = vmatpush1.msra.mxu0 %v319
        %505 = vmatprep.subr.mxu0 0.0
        %506 = vmatpush2.msra.mxu0 0.0
        %507 = vmatprep.subr.mxu0 0.0
        %508 = vmatpush2.msra.mxu0 0.0
        %509 = vmatprep.subr.mxu0 0.0
        %510 = vmatpush2.msra.mxu0 0.0
        %511 = vmatprep.subr.mxu0 0.0
        %512 = vmatpush2.msra.mxu0 0.0
        %513 = vmatprep.subr.mxu0 0.0
        %514 = vmatpush2.msra.mxu0 0.0
        %515 = vmatprep.subr.mxu0 0.0
        %516 = vmatpush2.msra.mxu0 0.0
        %517 = vmatprep.subr.mxu0 0.0
        %518 = vmatpush2.msra.mxu0 0.0
        %519 = vmatprep.subr.mxu0 0.0
        %520 = vmatpush2.msra.mxu0 0.0
        %521 = vmatprep.subr.mxu0 0.0
        %522 = vmatpush2.msra.mxu0 0.0
        %523 = vmatprep.subr.mxu0 0.0
        %524 = vmatpush2.msra.mxu0 0.0
        %525 = vmatprep.subr.mxu0 0.0
        %526 = vmatpush2.msra.mxu0 0.0
        %527 = vmatprep.subr.mxu0 0.0
        %528 = vmatpush2.msra.mxu0 0.0
        %529 = vmatprep.subr.mxu0 0.0
        %530 = vmatpush2.msra.mxu0 0.0
        %531 = vmatprep.subr.mxu0 0.0
        %532 = vmatpush2.msra.mxu0 0.0
        %533 = vmatprep.subr.mxu0 0.0
        %534 = vmatpush2.msra.mxu0 0.0
        %535 = vmatprep.subr.mxu0 0.0
        %536 = vmatpush2.msra.mxu0 0.0
        %537 = vmatprep.mubr.f32.mxu0 0.0
        %538 = vmatmul.mubr.f32.gmra.mxu0 %v373
        %v539 = vpop.f32.mrf.mxu0
        %v540 = vadd.f32 0.0, %v539
        %v541 = vpop.f32.mrf.mxu0
        %v542 = vadd.f32 0.0, %v541
        %543 = vmatprep.mubr.f32.mxu0 0.0
        %544 = vmatmul.mubr.f32.gmra.mxu0 %v376
        %v545 = vpop.f32.mrf.mxu0
        %v546 = vadd.f32 0.0, %v545
        %v547 = vpop.f32.mrf.mxu0
        %v548 = vadd.f32 0.0, %v547
        %549 = vmatprep.mubr.f32.mxu0 0.0
        %550 = vmatmul.mubr.f32.gmra.mxu0 %v379
        %v551 = vpop.f32.mrf.mxu0
        %v552 = vadd.f32 0.0, %v551
        %v553 = vpop.f32.mrf.mxu0
        %v554 = vadd.f32 0.0, %v553
        %555 = vmatprep.mubr.f32.mxu0 0.0
        %556 = vmatmul.mubr.f32.gmra.mxu0 %v382
        %v557 = vpop.f32.mrf.mxu0
        %v558 = vadd.f32 0.0, %v557
        %v559 = vpop.f32.mrf.mxu0
        %v560 = vadd.f32 0.0, %v559
        %561 = vdwg.mxu0
        %562 = vmatprep.subr.mxu0 0.0
        %563 = vmatpush1.msra.mxu0 0.0
        %564 = vmatprep.subr.mxu0 0.0
        %565 = vmatpush1.msra.mxu0 0.0
        %566 = vmatprep.subr.mxu0 0.0
        %567 = vmatpush1.msra.mxu0 0.0
        %568 = vmatprep.subr.mxu0 0.0
        %569 = vmatpush1.msra.mxu0 0.0
        %570 = vmatprep.subr.mxu0 0.0
        %571 = vmatpush1.msra.mxu0 0.0
        %572 = vmatprep.subr.mxu0 0.0
        %573 = vmatpush1.msra.mxu0 0.0
        %574 = vmatprep.subr.mxu0 0.0
        %575 = vmatpush1.msra.mxu0 0.0
        %576 = vmatprep.subr.mxu0 0.0
        %577 = vmatpush1.msra.mxu0 0.0
        %578 = vmatprep.subr.mxu0 %v350
        %579 = vmatpush1.msra.mxu0 %v349
        %580 = vmatprep.subr.mxu0 %v348
        %581 = vmatpush1.msra.mxu0 %v347
        %582 = vmatprep.subr.mxu0 %v346
        %583 = vmatpush1.msra.mxu0 %v345
        %584 = vmatprep.subr.mxu0 %v344
        %585 = vmatpush1.msra.mxu0 %v343
        %586 = vmatprep.subr.mxu0 %v342
        %587 = vmatpush1.msra.mxu0 %v341
        %588 = vmatprep.subr.mxu0 %v340
        %589 = vmatpush1.msra.mxu0 %v339
        %590 = vmatprep.subr.mxu0 %v338
        %591 = vmatpush1.msra.mxu0 %v337
        %592 = vmatprep.subr.mxu0 %v336
        %593 = vmatpush1.msra.mxu0 %v335
        %594 = vmatprep.subr.mxu0 0.0
        %595 = vmatpush2.msra.mxu0 0.0
        %596 = vmatprep.subr.mxu0 0.0
        %597 = vmatpush2.msra.mxu0 0.0
        %598 = vmatprep.subr.mxu0 0.0
        %599 = vmatpush2.msra.mxu0 0.0
        %600 = vmatprep.subr.mxu0 0.0
        %601 = vmatpush2.msra.mxu0 0.0
        %602 = vmatprep.subr.mxu0 0.0
        %603 = vmatpush2.msra.mxu0 0.0
        %604 = vmatprep.subr.mxu0 0.0
        %605 = vmatpush2.msra.mxu0 0.0
        %606 = vmatprep.subr.mxu0 0.0
        %607 = vmatpush2.msra.mxu0 0.0
        %608 = vmatprep.subr.mxu0 0.0
        %609 = vmatpush2.msra.mxu0 0.0
        %610 = vmatprep.subr.mxu0 0.0
        %611 = vmatpush2.msra.mxu0 0.0
        %612 = vmatprep.subr.mxu0 0.0
        %613 = vmatpush2.msra.mxu0 0.0
        %614 = vmatprep.subr.mxu0 0.0
        %615 = vmatpush2.msra.mxu0 0.0
        %616 = vmatprep.subr.mxu0 0.0
        %617 = vmatpush2.msra.mxu0 0.0
        %618 = vmatprep.subr.mxu0 0.0
        %619 = vmatpush2.msra.mxu0 0.0
        %620 = vmatprep.subr.mxu0 0.0
        %621 = vmatpush2.msra.mxu0 0.0
        %622 = vmatprep.subr.mxu0 0.0
        %623 = vmatpush2.msra.mxu0 0.0
        %624 = vmatprep.subr.mxu0 0.0
        %625 = vmatpush2.msra.mxu0 0.0
        %626 = vmatprep.mubr.f32.mxu0 0.0
        %627 = vmatmul.mubr.f32.gmra.mxu0 %v373
        %v628 = vpop.f32.mrf.mxu0
        %v629 = vadd.f32 0.0, %v628
        %v630 = vpop.f32.mrf.mxu0
        %v631 = vadd.f32 0.0, %v630
        %632 = vmatprep.mubr.f32.mxu0 0.0
        %633 = vmatmul.mubr.f32.gmra.mxu0 %v376
        %v634 = vpop.f32.mrf.mxu0
        %v635 = vadd.f32 0.0, %v634
        %v636 = vpop.f32.mrf.mxu0
        %v637 = vadd.f32 0.0, %v636
        %638 = vmatprep.mubr.f32.mxu0 0.0
        %639 = vmatmul.mubr.f32.gmra.mxu0 %v379
        %v640 = vpop.f32.mrf.mxu0
        %v641 = vadd.f32 0.0, %v640
        %v642 = vpop.f32.mrf.mxu0
        %v643 = vadd.f32 0.0, %v642
        %644 = vmatprep.mubr.f32.mxu0 0.0
        %645 = vmatmul.mubr.f32.gmra.mxu0 %v382
        %v646 = vpop.f32.mrf.mxu0
        %v647 = vadd.f32 0.0, %v646
        %v648 = vpop.f32.mrf.mxu0
        %v649 = vadd.f32 0.0, %v648
        %650 = vdwg.mxu0
        %651 = vmatprep.subr.mxu0 0.0
        %652 = vmatpush1.msra.mxu0 0.0
        %653 = vmatprep.subr.mxu0 0.0
        %654 = vmatpush1.msra.mxu0 0.0
        %655 = vmatprep.subr.mxu0 0.0
        %656 = vmatpush1.msra.mxu0 0.0
        %657 = vmatprep.subr.mxu0 0.0
        %658 = vmatpush1.msra.mxu0 0.0
        %659 = vmatprep.subr.mxu0 0.0
        %660 = vmatpush1.msra.mxu0 0.0
        %661 = vmatprep.subr.mxu0 0.0
        %662 = vmatpush1.msra.mxu0 0.0
        %663 = vmatprep.subr.mxu0 0.0
        %664 = vmatpush1.msra.mxu0 0.0
        %665 = vmatprep.subr.mxu0 0.0
        %666 = vmatpush1.msra.mxu0 0.0
        %667 = vmatprep.subr.mxu0 %v366
        %668 = vmatpush1.msra.mxu0 %v365
        %669 = vmatprep.subr.mxu0 %v364
        %670 = vmatpush1.msra.mxu0 %v363
        %671 = vmatprep.subr.mxu0 %v362
        %672 = vmatpush1.msra.mxu0 %v361
        %673 = vmatprep.subr.mxu0 %v360
        %674 = vmatpush1.msra.mxu0 %v359
        %675 = vmatprep.subr.mxu0 %v358
        %676 = vmatpush1.msra.mxu0 %v357
        %677 = vmatprep.subr.mxu0 %v356
        %678 = vmatpush1.msra.mxu0 %v355
        %679 = vmatprep.subr.mxu0 %v354
        %680 = vmatpush1.msra.mxu0 %v353
        %681 = vmatprep.subr.mxu0 %v352
        %682 = vmatpush1.msra.mxu0 %v351
        %683 = vmatprep.subr.mxu0 0.0
        %684 = vmatpush2.msra.mxu0 0.0
        %685 = vmatprep.subr.mxu0 0.0
        %686 = vmatpush2.msra.mxu0 0.0
        %687 = vmatprep.subr.mxu0 0.0
        %688 = vmatpush2.msra.mxu0 0.0
        %689 = vmatprep.subr.mxu0 0.0
        %690 = vmatpush2.msra.mxu0 0.0
        %691 = vmatprep.subr.mxu0 0.0
        %692 = vmatpush2.msra.mxu0 0.0
        %693 = vmatprep.subr.mxu0 0.0
        %694 = vmatpush2.msra.mxu0 0.0
        %695 = vmatprep.subr.mxu0 0.0
        %696 = vmatpush2.msra.mxu0 0.0
        %697 = vmatprep.subr.mxu0 0.0
        %698 = vmatpush2.msra.mxu0 0.0
        %699 = vmatprep.subr.mxu0 0.0
        %700 = vmatpush2.msra.mxu0 0.0
        %701 = vmatprep.subr.mxu0 0.0
        %702 = vmatpush2.msra.mxu0 0.0
        %703 = vmatprep.subr.mxu0 0.0
        %704 = vmatpush2.msra.mxu0 0.0
        %705 = vmatprep.subr.mxu0 0.0
        %706 = vmatpush2.msra.mxu0 0.0
        %707 = vmatprep.subr.mxu0 0.0
        %708 = vmatpush2.msra.mxu0 0.0
        %709 = vmatprep.subr.mxu0 0.0
        %710 = vmatpush2.msra.mxu0 0.0
        %711 = vmatprep.subr.mxu0 0.0
        %712 = vmatpush2.msra.mxu0 0.0
        %713 = vmatprep.subr.mxu0 0.0
        %714 = vmatpush2.msra.mxu0 0.0
        %715 = vmatprep.mubr.f32.mxu0 0.0
        %716 = vmatmul.mubr.f32.gmra.mxu0 %v373
        %v717 = vpop.f32.mrf.mxu0
        %v718 = vadd.f32 0.0, %v717
        %v719 = vpop.f32.mrf.mxu0
        %v720 = vadd.f32 0.0, %v719
        %721 = vmatprep.mubr.f32.mxu0 0.0
        %722 = vmatmul.mubr.f32.gmra.mxu0 %v376
        %v723 = vpop.f32.mrf.mxu0
        %v724 = vadd.f32 0.0, %v723
        %v725 = vpop.f32.mrf.mxu0
        %v726 = vadd.f32 0.0, %v725
        %727 = vmatprep.mubr.f32.mxu0 0.0
        %728 = vmatmul.mubr.f32.gmra.mxu0 %v379
        %v729 = vpop.f32.mrf.mxu0
        %v730 = vadd.f32 0.0, %v729
        %v731 = vpop.f32.mrf.mxu0
        %v732 = vadd.f32 0.0, %v731
        %733 = vmatprep.mubr.f32.mxu0 0.0
        %734 = vmatmul.mubr.f32.gmra.mxu0 %v382
        %v735 = vpop.f32.mrf.mxu0
        %v736 = vadd.f32 0.0, %v735
        %v737 = vpop.f32.mrf.mxu0
        %v738 = vadd.f32 0.0, %v737
        %739 = vdwg.mxu0
        %744 = vrot.lane.b32.xlu0 %v453, 17
        %v745 = vpop.permute.xlu0 %744
        %746 = vrot.lane.b32.xlu0 %v542, 17
        %v747 = vpop.permute.xlu0 %746
        %748 = vrot.lane.b32.xlu0 %v631, 17
        %v749 = vpop.permute.xlu0 %748
        %750 = vrot.lane.b32.xlu0 %v720, 17
        %v751 = vpop.permute.xlu0 %750
        %760 = vrot.lane.b32.xlu0 %v451, 17
        %v761 = vpop.permute.xlu0 %760
        %762 = vrot.lane.b32.xlu0 %v540, 17
        %v763 = vpop.permute.xlu0 %762
        %764 = vrot.lane.b32.xlu0 %v629, 17
        %v765 = vpop.permute.xlu0 %764
        %766 = vrot.lane.b32.xlu0 %v718, 17
        %v767 = vpop.permute.xlu0 %766
        %vm768 = vcmask 138240
        %v769 = vsel %vm768, %v761, %v745
        %v770 = vsel %vm768, %v763, %v747
        %v771 = vsel %vm768, %v765, %v749
        %v772 = vsel %vm768, %v767, %v751
        %v781 = vsel %vm768, %v745, %v761
        %v782 = vsel %vm768, %v747, %v763
        %v783 = vsel %vm768, %v749, %v765
        %v784 = vsel %vm768, %v751, %v767
        %v785 = vld [vmem:[%s3] ss:$8 sm:$0x3]
        %v787 = vlaneseq
        %v788 = vshrl.u32 %v787, 7
        %v789 = vsub.s32 0, %v788
        %v790 = vrot.slane %v785, %v789
        %v791 = vlaneseq
        %v792 = vshrl.u32 %v791, 7
        %v793 = vsub.s32 1, %v792
        %v794 = vrot.slane %v785, %v793
        %v797 = vmul.f32 %v781, %v790
        %v798 = vmul.f32 %v769, %v794
        %v799 = vmul.f32 %v782, %v790
        %v800 = vmul.f32 %v770, %v794
        %v801 = vmul.f32 %v783, %v790
        %v802 = vmul.f32 %v771, %v794
        %v803 = vmul.f32 %v784, %v790
        %v804 = vmul.f32 %v772, %v794
        %v805 = vadd.f32 %v797, 0.0
        %v806 = vadd.f32 %v798, 0.0
        %v807 = vadd.f32 %v799, 0.0
        %v808 = vadd.f32 %v800, 0.0
        %v809 = vadd.f32 %v801, 0.0
        %v810 = vadd.f32 %v802, 0.0
        %v811 = vadd.f32 %v803, 0.0
        %v812 = vadd.f32 %v804, 0.0
        %813 = vrot.lane.b32.xlu0 %v453, 16
        %v814 = vpop.permute.xlu0 %813
        %815 = vrot.lane.b32.xlu0 %v542, 16
        %v816 = vpop.permute.xlu0 %815
        %817 = vrot.lane.b32.xlu0 %v631, 16
        %v818 = vpop.permute.xlu0 %817
        %819 = vrot.lane.b32.xlu0 %v720, 16
        %v820 = vpop.permute.xlu0 %819
        %825 = vrot.lane.b32.xlu0 %v451, 16
        %v826 = vpop.permute.xlu0 %825
        %827 = vrot.lane.b32.xlu0 %v540, 16
        %v828 = vpop.permute.xlu0 %827
        %829 = vrot.lane.b32.xlu0 %v629, 16
        %v830 = vpop.permute.xlu0 %829
        %831 = vrot.lane.b32.xlu0 %v718, 16
        %v832 = vpop.permute.xlu0 %831
        %vm833 = vcmask 130048
        %v834 = vsel %vm833, %v826, %v814
        %v835 = vsel %vm833, %v828, %v816
        %v836 = vsel %vm833, %v830, %v818
        %v837 = vsel %vm833, %v832, %v820
        %v846 = vsel %vm833, %v814, %v826
        %v847 = vsel %vm833, %v816, %v828
        %v848 = vsel %vm833, %v818, %v830
        %v849 = vsel %vm833, %v820, %v832
        %s850 = scalar_lea.vmem %s3, 1
        %v851 = vld [vmem:[%s850] ss:$8 sm:$0x3]
        %v853 = vlaneseq
        %v854 = vshrl.u32 %v853, 7
        %v855 = vsub.s32 0, %v854
        %v856 = vrot.slane %v851, %v855
        %v857 = vlaneseq
        %v858 = vshrl.u32 %v857, 7
        %v859 = vsub.s32 1, %v858
        %v860 = vrot.slane %v851, %v859
        %v863 = vmul.f32 %v846, %v856
        %v864 = vmul.f32 %v834, %v860
        %v865 = vmul.f32 %v847, %v856
        %v866 = vmul.f32 %v835, %v860
        %v867 = vmul.f32 %v848, %v856
        %v868 = vmul.f32 %v836, %v860
        %v869 = vmul.f32 %v849, %v856
        %v870 = vmul.f32 %v837, %v860
        %v879 = vrot.slane %v863, 3
        %v880 = vrot.slane %v864, 3
        %v881 = vrot.slane %v865, 3
        %v882 = vrot.slane %v866, 3
        %v883 = vrot.slane %v867, 3
        %v884 = vrot.slane %v868, 3
        %v885 = vrot.slane %v869, 3
        %v886 = vrot.slane %v870, 3
        %v895 = vadd.f32 %v805, %v879
        %v896 = vadd.f32 %v806, %v880
        %v897 = vadd.f32 %v807, %v881
        %v898 = vadd.f32 %v808, %v882
        %v899 = vadd.f32 %v809, %v883
        %v900 = vadd.f32 %v810, %v884
        %v901 = vadd.f32 %v811, %v885
        %v902 = vadd.f32 %v812, %v886
        %907 = vrot.lane.b32.xlu0 %v453, 15
        %v908 = vpop.permute.xlu0 %907
        %909 = vrot.lane.b32.xlu0 %v459, 15
        %v910 = vpop.permute.xlu0 %909
        %911 = vrot.lane.b32.xlu0 %v542, 15
        %v912 = vpop.permute.xlu0 %911
        %913 = vrot.lane.b32.xlu0 %v548, 15
        %v914 = vpop.permute.xlu0 %913
        %915 = vrot.lane.b32.xlu0 %v631, 15
        %v916 = vpop.permute.xlu0 %915
        %917 = vrot.lane.b32.xlu0 %v637, 15
        %v918 = vpop.permute.xlu0 %917
        %919 = vrot.lane.b32.xlu0 %v720, 15
        %v920 = vpop.permute.xlu0 %919
        %921 = vrot.lane.b32.xlu0 %v726, 15
        %v922 = vpop.permute.xlu0 %921
        %935 = vrot.lane.b32.xlu0 %v451, 15
        %v936 = vpop.permute.xlu0 %935
        %937 = vrot.lane.b32.xlu0 %v457, 15
        %v938 = vpop.permute.xlu0 %937
        %939 = vrot.lane.b32.xlu0 %v540, 15
        %v940 = vpop.permute.xlu0 %939
        %941 = vrot.lane.b32.xlu0 %v546, 15
        %v942 = vpop.permute.xlu0 %941
        %943 = vrot.lane.b32.xlu0 %v629, 15
        %v944 = vpop.permute.xlu0 %943
        %945 = vrot.lane.b32.xlu0 %v635, 15
        %v946 = vpop.permute.xlu0 %945
        %947 = vrot.lane.b32.xlu0 %v718, 15
        %v948 = vpop.permute.xlu0 %947
        %949 = vrot.lane.b32.xlu0 %v724, 15
        %v950 = vpop.permute.xlu0 %949
        %vm951 = vcmask 121856
        %v952 = vsel %vm951, %v936, %v908
        %v953 = vsel %vm951, %v938, %v910
        %v954 = vsel %vm951, %v940, %v912
        %v955 = vsel %vm951, %v942, %v914
        %v956 = vsel %vm951, %v944, %v916
        %v957 = vsel %vm951, %v946, %v918
        %v958 = vsel %vm951, %v948, %v920
        %v959 = vsel %vm951, %v950, %v922
        %v976 = vsel %vm951, %v908, %v936
        %v977 = vsel %vm951, %v910, %v938
        %v978 = vsel %vm951, %v912, %v940
        %v979 = vsel %vm951, %v914, %v942
        %v980 = vsel %vm951, %v916, %v944
        %v981 = vsel %vm951, %v918, %v946
        %v982 = vsel %vm951, %v920, %v948
        %v983 = vsel %vm951, %v922, %v950
        %s984 = scalar_lea.vmem %s3, 2
        %v985 = vld [vmem:[%s984] ss:$8 sm:$0x3]
        %v987 = vlaneseq
        %v988 = vshrl.u32 %v987, 7
        %v989 = vsub.s32 0, %v988
        %v990 = vrot.slane %v985, %v989
        %v991 = vlaneseq
        %v992 = vshrl.u32 %v991, 7
        %v993 = vsub.s32 1, %v992
        %v994 = vrot.slane %v985, %v993
        %v997 = vmul.f32 %v976, %v990
        %v998 = vmul.f32 %v952, %v994
        %v999 = vmul.f32 %v977, %v990
        %v1000 = vmul.f32 %v953, %v994
        %v1001 = vmul.f32 %v978, %v990
        %v1002 = vmul.f32 %v954, %v994
        %v1003 = vmul.f32 %v979, %v990
        %v1004 = vmul.f32 %v955, %v994
        %v1005 = vmul.f32 %v980, %v990
        %v1006 = vmul.f32 %v956, %v994
        %v1007 = vmul.f32 %v981, %v990
        %v1008 = vmul.f32 %v957, %v994
        %v1009 = vmul.f32 %v982, %v990
        %v1010 = vmul.f32 %v958, %v994
        %v1011 = vmul.f32 %v983, %v990
        %v1012 = vmul.f32 %v959, %v994
        %vm1029 = vcmask 1041408
        %v1030 = vrot.slane %v997, 6
        %v1031 = vrot.slane %v999, 6
        %v1032 = vsel %vm1029, %v1030, %v1031
        %v1033 = vrot.slane %v998, 6
        %v1034 = vrot.slane %v1000, 6
        %v1035 = vsel %vm1029, %v1033, %v1034
        %v1036 = vrot.slane %v1001, 6
        %v1037 = vrot.slane %v1003, 6
        %v1038 = vsel %vm1029, %v1036, %v1037
        %v1039 = vrot.slane %v1002, 6
        %v1040 = vrot.slane %v1004, 6
        %v1041 = vsel %vm1029, %v1039, %v1040
        %v1042 = vrot.slane %v1005, 6
        %v1043 = vrot.slane %v1007, 6
        %v1044 = vsel %vm1029, %v1042, %v1043
        %v1045 = vrot.slane %v1006, 6
        %v1046 = vrot.slane %v1008, 6
        %v1047 = vsel %vm1029, %v1045, %v1046
        %v1048 = vrot.slane %v1009, 6
        %v1049 = vrot.slane %v1011, 6
        %v1050 = vsel %vm1029, %v1048, %v1049
        %v1051 = vrot.slane %v1010, 6
        %v1052 = vrot.slane %v1012, 6
        %v1053 = vsel %vm1029, %v1051, %v1052
        %v1062 = vadd.f32 %v895, %v1032
        %v1063 = vadd.f32 %v896, %v1035
        %v1064 = vadd.f32 %v897, %v1038
        %v1065 = vadd.f32 %v898, %v1041
        %v1066 = vadd.f32 %v899, %v1044
        %v1067 = vadd.f32 %v900, %v1047
        %v1068 = vadd.f32 %v901, %v1050
        %v1069 = vadd.f32 %v902, %v1053
        %1070 = vrot.lane.b32.xlu0 %v459, 1
        %v1071 = vpop.permute.xlu0 %1070
        %1072 = vrot.lane.b32.xlu0 %v548, 1
        %v1073 = vpop.permute.xlu0 %1072
        %1074 = vrot.lane.b32.xlu0 %v637, 1
        %v1075 = vpop.permute.xlu0 %1074
        %1076 = vrot.lane.b32.xlu0 %v726, 1
        %v1077 = vpop.permute.xlu0 %1076
        %1082 = vrot.lane.b32.xlu0 %v457, 1
        %v1083 = vpop.permute.xlu0 %1082
        %1084 = vrot.lane.b32.xlu0 %v546, 1
        %v1085 = vpop.permute.xlu0 %1084
        %1086 = vrot.lane.b32.xlu0 %v635, 1
        %v1087 = vpop.permute.xlu0 %1086
        %1088 = vrot.lane.b32.xlu0 %v724, 1
        %v1089 = vpop.permute.xlu0 %1088
        %vm1090 = vcmask 7168
        %v1091 = vsel %vm1090, %v1083, %v1071
        %v1092 = vsel %vm1090, %v1085, %v1073
        %v1093 = vsel %vm1090, %v1087, %v1075
        %v1094 = vsel %vm1090, %v1089, %v1077
        %v1103 = vsel %vm1090, %v1071, %v1083
        %v1104 = vsel %vm1090, %v1073, %v1085
        %v1105 = vsel %vm1090, %v1075, %v1087
        %v1106 = vsel %vm1090, %v1077, %v1089
        %s1107 = scalar_lea.vmem %s3, 3
        %v1108 = vld [vmem:[%s1107] ss:$8 sm:$0x3]
        %v1110 = vlaneseq
        %v1111 = vshrl.u32 %v1110, 7
        %v1112 = vsub.s32 0, %v1111
        %v1113 = vrot.slane %v1108, %v1112
        %v1114 = vlaneseq
        %v1115 = vshrl.u32 %v1114, 7
        %v1116 = vsub.s32 1, %v1115
        %v1117 = vrot.slane %v1108, %v1116
        %v1120 = vmul.f32 %v1103, %v1113
        %v1121 = vmul.f32 %v1091, %v1117
        %v1122 = vmul.f32 %v1104, %v1113
        %v1123 = vmul.f32 %v1092, %v1117
        %v1124 = vmul.f32 %v1105, %v1113
        %v1125 = vmul.f32 %v1093, %v1117
        %v1126 = vmul.f32 %v1106, %v1113
        %v1127 = vmul.f32 %v1094, %v1117
        %v1136 = vrot.slane %v1120, 1
        %v1137 = vrot.slane %v1121, 1
        %v1138 = vrot.slane %v1122, 1
        %v1139 = vrot.slane %v1123, 1
        %v1140 = vrot.slane %v1124, 1
        %v1141 = vrot.slane %v1125, 1
        %v1142 = vrot.slane %v1126, 1
        %v1143 = vrot.slane %v1127, 1
        %v1152 = vadd.f32 %v1062, %v1136
        %v1153 = vadd.f32 %v1063, %v1137
        %v1154 = vadd.f32 %v1064, %v1138
        %v1155 = vadd.f32 %v1065, %v1139
        %v1156 = vadd.f32 %v1066, %v1140
        %v1157 = vadd.f32 %v1067, %v1141
        %v1158 = vadd.f32 %v1068, %v1142
        %v1159 = vadd.f32 %v1069, %v1143
        %v1160 = vrot.slane %v457, 4
        %v1161 = vrot.slane %v459, 4
        %v1162 = vrot.slane %v546, 4
        %v1163 = vrot.slane %v548, 4
        %v1164 = vrot.slane %v635, 4
        %v1165 = vrot.slane %v637, 4
        %v1166 = vrot.slane %v724, 4
        %v1167 = vrot.slane %v726, 4
        %v1176 = vadd.f32 %v1152, %v1160
        %v1177 = vadd.f32 %v1153, %v1161
        %v1178 = vadd.f32 %v1154, %v1162
        %v1179 = vadd.f32 %v1155, %v1163
        %v1180 = vadd.f32 %v1156, %v1164
        %v1181 = vadd.f32 %v1157, %v1165
        %v1182 = vadd.f32 %v1158, %v1166
        %v1183 = vadd.f32 %v1159, %v1167
        %1192 = vrot.lane.b32.xlu0 %v457, 127
        %v1193 = vpop.permute.xlu0 %1192
        %1194 = vrot.lane.b32.xlu0 %v459, 127
        %v1195 = vpop.permute.xlu0 %1194
        %1196 = vrot.lane.b32.xlu0 %v463, 127
        %v1197 = vpop.permute.xlu0 %1196
        %1198 = vrot.lane.b32.xlu0 %v465, 127
        %v1199 = vpop.permute.xlu0 %1198
        %1200 = vrot.lane.b32.xlu0 %v546, 127
        %v1201 = vpop.permute.xlu0 %1200
        %1202 = vrot.lane.b32.xlu0 %v548, 127
        %v1203 = vpop.permute.xlu0 %1202
        %1204 = vrot.lane.b32.xlu0 %v552, 127
        %v1205 = vpop.permute.xlu0 %1204
        %1206 = vrot.lane.b32.xlu0 %v554, 127
        %v1207 = vpop.permute.xlu0 %1206
        %1208 = vrot.lane.b32.xlu0 %v635, 127
        %v1209 = vpop.permute.xlu0 %1208
        %1210 = vrot.lane.b32.xlu0 %v637, 127
        %v1211 = vpop.permute.xlu0 %1210
        %1212 = vrot.lane.b32.xlu0 %v641, 127
        %v1213 = vpop.permute.xlu0 %1212
        %1214 = vrot.lane.b32.xlu0 %v643, 127
        %v1215 = vpop.permute.xlu0 %1214
        %1216 = vrot.lane.b32.xlu0 %v724, 127
        %v1217 = vpop.permute.xlu0 %1216
        %1218 = vrot.lane.b32.xlu0 %v726, 127
        %v1219 = vpop.permute.xlu0 %1218
        %1220 = vrot.lane.b32.xlu0 %v730, 127
        %v1221 = vpop.permute.xlu0 %1220
        %1222 = vrot.lane.b32.xlu0 %v732, 127
        %v1223 = vpop.permute.xlu0 %1222
        %vm1224 = vcmask 1039360
        %v1225 = vsel %vm1224, %v1193, %v1195
        %v1226 = vsel %vm1224, %v1197, %v1199
        %v1227 = vsel %vm1224, %v1201, %v1203
        %v1228 = vsel %vm1224, %v1205, %v1207
        %v1229 = vsel %vm1224, %v1209, %v1211
        %v1230 = vsel %vm1224, %v1213, %v1215
        %v1231 = vsel %vm1224, %v1217, %v1219
        %v1232 = vsel %vm1224, %v1221, %v1223
        %v1257 = vsel %vm1224, %v1195, %v1193
        %v1258 = vsel %vm1224, %v1199, %v1197
        %v1259 = vsel %vm1224, %v1203, %v1201
        %v1260 = vsel %vm1224, %v1207, %v1205
        %v1261 = vsel %vm1224, %v1211, %v1209
        %v1262 = vsel %vm1224, %v1215, %v1213
        %v1263 = vsel %vm1224, %v1219, %v1217
        %v1264 = vsel %vm1224, %v1223, %v1221
        %s1265 = scalar_lea.vmem %s3, 5
        %v1266 = vld [vmem:[%s1265] ss:$8 sm:$0x3]
        %v1268 = vlaneseq
        %v1269 = vshrl.u32 %v1268, 7
        %v1270 = vsub.s32 0, %v1269
        %v1271 = vrot.slane %v1266, %v1270
        %v1272 = vlaneseq
        %v1273 = vshrl.u32 %v1272, 7
        %v1274 = vsub.s32 1, %v1273
        %v1275 = vrot.slane %v1266, %v1274
        %v1278 = vmul.f32 %v1225, %v1271
        %v1279 = vmul.f32 %v1257, %v1275
        %v1280 = vmul.f32 %v1226, %v1271
        %v1281 = vmul.f32 %v1258, %v1275
        %v1282 = vmul.f32 %v1227, %v1271
        %v1283 = vmul.f32 %v1259, %v1275
        %v1284 = vmul.f32 %v1228, %v1271
        %v1285 = vmul.f32 %v1260, %v1275
        %v1286 = vmul.f32 %v1229, %v1271
        %v1287 = vmul.f32 %v1261, %v1275
        %v1288 = vmul.f32 %v1230, %v1271
        %v1289 = vmul.f32 %v1262, %v1275
        %v1290 = vmul.f32 %v1231, %v1271
        %v1291 = vmul.f32 %v1263, %v1275
        %v1292 = vmul.f32 %v1232, %v1271
        %v1293 = vmul.f32 %v1264, %v1275
        %vm1310 = vcmask 1040384
        %v1311 = vrot.slane %v1278, 7
        %v1312 = vrot.slane %v1280, 7
        %v1313 = vsel %vm1310, %v1311, %v1312
        %v1314 = vrot.slane %v1279, 7
        %v1315 = vrot.slane %v1281, 7
        %v1316 = vsel %vm1310, %v1314, %v1315
        %v1317 = vrot.slane %v1282, 7
        %v1318 = vrot.slane %v1284, 7
        %v1319 = vsel %vm1310, %v1317, %v1318
        %v1320 = vrot.slane %v1283, 7
        %v1321 = vrot.slane %v1285, 7
        %v1322 = vsel %vm1310, %v1320, %v1321
        %v1323 = vrot.slane %v1286, 7
        %v1324 = vrot.slane %v1288, 7
        %v1325 = vsel %vm1310, %v1323, %v1324
        %v1326 = vrot.slane %v1287, 7
        %v1327 = vrot.slane %v1289, 7
        %v1328 = vsel %vm1310, %v1326, %v1327
        %v1329 = vrot.slane %v1290, 7
        %v1330 = vrot.slane %v1292, 7
        %v1331 = vsel %vm1310, %v1329, %v1330
        %v1332 = vrot.slane %v1291, 7
        %v1333 = vrot.slane %v1293, 7
        %v1334 = vsel %vm1310, %v1332, %v1333
        %v1343 = vadd.f32 %v1176, %v1313
        %v1344 = vadd.f32 %v1177, %v1316
        %v1345 = vadd.f32 %v1178, %v1319
        %v1346 = vadd.f32 %v1179, %v1322
        %v1347 = vadd.f32 %v1180, %v1325
        %v1348 = vadd.f32 %v1181, %v1328
        %v1349 = vadd.f32 %v1182, %v1331
        %v1350 = vadd.f32 %v1183, %v1334
        %1351 = vrot.lane.b32.xlu0 %v463, 113
        %v1352 = vpop.permute.xlu0 %1351
        %1353 = vrot.lane.b32.xlu0 %v465, 113
        %v1354 = vpop.permute.xlu0 %1353
        %1355 = vrot.lane.b32.xlu0 %v552, 113
        %v1356 = vpop.permute.xlu0 %1355
        %1357 = vrot.lane.b32.xlu0 %v554, 113
        %v1358 = vpop.permute.xlu0 %1357
        %1359 = vrot.lane.b32.xlu0 %v641, 113
        %v1360 = vpop.permute.xlu0 %1359
        %1361 = vrot.lane.b32.xlu0 %v643, 113
        %v1362 = vpop.permute.xlu0 %1361
        %1363 = vrot.lane.b32.xlu0 %v730, 113
        %v1364 = vpop.permute.xlu0 %1363
        %1365 = vrot.lane.b32.xlu0 %v732, 113
        %v1366 = vpop.permute.xlu0 %1365
        %vm1367 = vcmask 924672
        %v1368 = vsel %vm1367, %v1352, %v1354
        %v1369 = vsel %vm1367, %v1356, %v1358
        %v1370 = vsel %vm1367, %v1360, %v1362
        %v1371 = vsel %vm1367, %v1364, %v1366
        %v1384 = vsel %vm1367, %v1354, %v1352
        %v1385 = vsel %vm1367, %v1358, %v1356
        %v1386 = vsel %vm1367, %v1362, %v1360
        %v1387 = vsel %vm1367, %v1366, %v1364
        %s1388 = scalar_lea.vmem %s3, 6
        %v1389 = vld [vmem:[%s1388] ss:$8 sm:$0x3]
        %v1391 = vlaneseq
        %v1392 = vshrl.u32 %v1391, 7
        %v1393 = vsub.s32 0, %v1392
        %v1394 = vrot.slane %v1389, %v1393
        %v1395 = vlaneseq
        %v1396 = vshrl.u32 %v1395, 7
        %v1397 = vsub.s32 1, %v1396
        %v1398 = vrot.slane %v1389, %v1397
        %v1401 = vmul.f32 %v1368, %v1394
        %v1402 = vmul.f32 %v1384, %v1398
        %v1403 = vmul.f32 %v1369, %v1394
        %v1404 = vmul.f32 %v1385, %v1398
        %v1405 = vmul.f32 %v1370, %v1394
        %v1406 = vmul.f32 %v1386, %v1398
        %v1407 = vmul.f32 %v1371, %v1394
        %v1408 = vmul.f32 %v1387, %v1398
        %v1417 = vrot.slane %v1401, 2
        %v1418 = vrot.slane %v1402, 2
        %v1419 = vrot.slane %v1403, 2
        %v1420 = vrot.slane %v1404, 2
        %v1421 = vrot.slane %v1405, 2
        %v1422 = vrot.slane %v1406, 2
        %v1423 = vrot.slane %v1407, 2
        %v1424 = vrot.slane %v1408, 2
        %v1433 = vadd.f32 %v1343, %v1417
        %v1434 = vadd.f32 %v1344, %v1418
        %v1435 = vadd.f32 %v1345, %v1419
        %v1436 = vadd.f32 %v1346, %v1420
        %v1437 = vadd.f32 %v1347, %v1421
        %v1438 = vadd.f32 %v1348, %v1422
        %v1439 = vadd.f32 %v1349, %v1423
        %v1440 = vadd.f32 %v1350, %v1424
        %1441 = vrot.lane.b32.xlu0 %v463, 112
        %v1442 = vpop.permute.xlu0 %1441
        %1443 = vrot.lane.b32.xlu0 %v465, 112
        %v1444 = vpop.permute.xlu0 %1443
        %1445 = vrot.lane.b32.xlu0 %v552, 112
        %v1446 = vpop.permute.xlu0 %1445
        %1447 = vrot.lane.b32.xlu0 %v554, 112
        %v1448 = vpop.permute.xlu0 %1447
        %1449 = vrot.lane.b32.xlu0 %v641, 112
        %v1450 = vpop.permute.xlu0 %1449
        %1451 = vrot.lane.b32.xlu0 %v643, 112
        %v1452 = vpop.permute.xlu0 %1451
        %1453 = vrot.lane.b32.xlu0 %v730, 112
        %v1454 = vpop.permute.xlu0 %1453
        %1455 = vrot.lane.b32.xlu0 %v732, 112
        %v1456 = vpop.permute.xlu0 %1455
        %vm1457 = vcmask 916480
        %v1458 = vsel %vm1457, %v1442, %v1444
        %v1459 = vsel %vm1457, %v1446, %v1448
        %v1460 = vsel %vm1457, %v1450, %v1452
        %v1461 = vsel %vm1457, %v1454, %v1456
        %v1474 = vsel %vm1457, %v1444, %v1442
        %v1475 = vsel %vm1457, %v1448, %v1446
        %v1476 = vsel %vm1457, %v1452, %v1450
        %v1477 = vsel %vm1457, %v1456, %v1454
        %s1478 = scalar_lea.vmem %s3, 7
        %v1479 = vld [vmem:[%s1478] ss:$8 sm:$0x3]
        %v1481 = vlaneseq
        %v1482 = vshrl.u32 %v1481, 7
        %v1483 = vsub.s32 0, %v1482
        %v1484 = vrot.slane %v1479, %v1483
        %v1485 = vlaneseq
        %v1486 = vshrl.u32 %v1485, 7
        %v1487 = vsub.s32 1, %v1486
        %v1488 = vrot.slane %v1479, %v1487
        %v1491 = vmul.f32 %v1458, %v1484
        %v1492 = vmul.f32 %v1474, %v1488
        %v1493 = vmul.f32 %v1459, %v1484
        %v1494 = vmul.f32 %v1475, %v1488
        %v1495 = vmul.f32 %v1460, %v1484
        %v1496 = vmul.f32 %v1476, %v1488
        %v1497 = vmul.f32 %v1461, %v1484
        %v1498 = vmul.f32 %v1477, %v1488
        %v1507 = vrot.slane %v1491, 5
        %v1508 = vrot.slane %v1492, 5
        %v1509 = vrot.slane %v1493, 5
        %v1510 = vrot.slane %v1494, 5
        %v1511 = vrot.slane %v1495, 5
        %v1512 = vrot.slane %v1496, 5
        %v1513 = vrot.slane %v1497, 5
        %v1514 = vrot.slane %v1498, 5
        %v1523 = vadd.f32 %v1433, %v1507
        %v1524 = vadd.f32 %v1434, %v1508
        %v1525 = vadd.f32 %v1435, %v1509
        %v1526 = vadd.f32 %v1436, %v1510
        %v1527 = vadd.f32 %v1437, %v1511
        %v1528 = vadd.f32 %v1438, %v1512
        %v1529 = vadd.f32 %v1439, %v1513
        %v1530 = vadd.f32 %v1440, %v1514
        %1539 = vrot.lane.b32.xlu0 %v469, 111
        %v1540 = vpop.permute.xlu0 %1539
        %1541 = vrot.lane.b32.xlu0 %v471, 111
        %v1542 = vpop.permute.xlu0 %1541
        %1543 = vrot.lane.b32.xlu0 %v558, 111
        %v1544 = vpop.permute.xlu0 %1543
        %1545 = vrot.lane.b32.xlu0 %v560, 111
        %v1546 = vpop.permute.xlu0 %1545
        %1547 = vrot.lane.b32.xlu0 %v647, 111
        %v1548 = vpop.permute.xlu0 %1547
        %1549 = vrot.lane.b32.xlu0 %v649, 111
        %v1550 = vpop.permute.xlu0 %1549
        %1551 = vrot.lane.b32.xlu0 %v736, 111
        %v1552 = vpop.permute.xlu0 %1551
        %1553 = vrot.lane.b32.xlu0 %v738, 111
        %v1554 = vpop.permute.xlu0 %1553
        %vm1555 = vcmask 908288
        %v1556 = vsel %vm1555, %v1540, %v1542
        %v1557 = vsel %vm1555, %v1544, %v1546
        %v1558 = vsel %vm1555, %v1548, %v1550
        %v1559 = vsel %vm1555, %v1552, %v1554
        %v1572 = vsel %vm1555, %v1542, %v1540
        %v1573 = vsel %vm1555, %v1546, %v1544
        %v1574 = vsel %vm1555, %v1550, %v1548
        %v1575 = vsel %vm1555, %v1554, %v1552
        %s1576 = scalar_lea.vmem %s3, 16
        %v1577 = vld [vmem:[%s1576] ss:$8 sm:$0x3]
        %v1579 = vlaneseq
        %v1580 = vshrl.u32 %v1579, 7
        %v1581 = vsub.s32 0, %v1580
        %v1582 = vrot.slane %v1577, %v1581
        %v1583 = vlaneseq
        %v1584 = vshrl.u32 %v1583, 7
        %v1585 = vsub.s32 1, %v1584
        %v1586 = vrot.slane %v1577, %v1585
        %v1589 = vmul.f32 %v1556, %v1582
        %v1590 = vmul.f32 %v1572, %v1586
        %v1591 = vmul.f32 %v1557, %v1582
        %v1592 = vmul.f32 %v1573, %v1586
        %v1593 = vmul.f32 %v1558, %v1582
        %v1594 = vmul.f32 %v1574, %v1586
        %v1595 = vmul.f32 %v1559, %v1582
        %v1596 = vmul.f32 %v1575, %v1586
        %v1597 = vadd.f32 %v1523, %v1589
        %v1598 = vadd.f32 %v1524, %v1590
        %v1599 = vadd.f32 %v1525, %v1591
        %v1600 = vadd.f32 %v1526, %v1592
        %v1601 = vadd.f32 %v1527, %v1593
        %v1602 = vadd.f32 %v1528, %v1594
        %v1603 = vadd.f32 %v1529, %v1595
        %v1604 = vadd.f32 %v1530, %v1596
        %v1605 = vld [vmem:[%s4] sm:$0x7]
        %1607 = vset.pattern.permute.xlu0 0
        %1608 = vperm.xlu0 %1607, %v1605
        %v1609 = vpop.permute.xlu0 %1608
        %v1611 = vadd.f32 %v1597, %v1609
        %v1612 = vadd.f32 %v1598, %v1609
        %v1613 = vadd.f32 %v1599, %v1609
        %v1614 = vadd.f32 %v1600, %v1609
        %v1615 = vadd.f32 %v1601, %v1609
        %v1616 = vadd.f32 %v1602, %v1609
        %v1617 = vadd.f32 %v1603, %v1609
        %v1618 = vadd.f32 %v1604, %v1609
        %s1619 = sld [smem:[#allocation2]]
        %v1620 = vld [vmem:[%s294] sm:$0x77]
        %v1621 = vld [vmem:[%s294 + $0x8] sm:$0x77]
        %v1622 = vld [vmem:[%s294 + $0x10] sm:$0x77]
        %v1623 = vld [vmem:[%s294 + $0x18] sm:$0x77]
        %v1632 = vcombine.low %v1611, %v1612
        %v1633 = vcombine.low %v1613, %v1614
        %v1634 = vcombine.low %v1615, %v1616
        %v1635 = vcombine.low %v1617, %v1618
        %v1640 = vsub.f32 %v1620, %v1632
        %v1641 = vsub.f32 %v1621, %v1633
        %v1642 = vsub.f32 %v1622, %v1634
        %v1643 = vsub.f32 %v1623, %v1635
        %v1644 = vstv %s1619
        %v1645 = vmul.f32 %v1640, %v1644
        %v1646 = vmul.f32 %v1641, %v1644
        %v1647 = vmul.f32 %v1642, %v1644
        %v1648 = vmul.f32 %v1643, %v1644
        %1649 = vst [vmem:[%s301] sm:$0x77] %v1645
        %1650 = vst [vmem:[%s301 + $0x8] sm:$0x77] %v1646
        %1651 = vst [vmem:[%s301 + $0x10] sm:$0x77] %v1647
        %1652 = vst [vmem:[%s301 + $0x18] sm:$0x77] %v1648
        %s1653 = smul.u32 4, %s21
        %p1654 = scmp.lt.s32.totalorder %s1653, 7
        %s1655 = scalar_select %p1654, %s1653, 7
        %s1656 = smul.addr %s1655, 2
        %s1657 = smul.addr %s1656, 4
        %s1658 = scalar_lea.vmem %s6, %s1657
        // Predicated region
        $region49: #{tpu_custom_call.1} parent=43 // pred_check
          %p1659 = pneg %p175
        $region50: #{tpu_custom_call.1} parent=43 // pred_check_branch
          %1661 = sbr.rel (%p1659) target = $region52
        $region51: #{tpu_custom_call.1} parent=43 // pred_region
          %s1662 = smul.u32 4, %s21
        $region52: #{tpu_custom_call.1} parent=43 // pred_fallthru
          _
      $region44: #{tpu_custom_call.1} parent=5 // pred_fallthru
        _
      %p1663 = scmp.le.s32.totalorder 2, %s16
      // Predicated region
      $region53: #{tpu_custom_call.1} parent=5 // pred_check
        %p1664 = pneg %p1663
      $region54: #{tpu_custom_call.1} parent=5 // pred_check_branch
        %1666 = sbr.rel (%p1664) target = $region56
      $region55: #{tpu_custom_call.1} parent=5 // pred_region
        %s1667 = ssub.s32 %s16, 2
        // Predicated region
        $region57: #{tpu_custom_call.1} parent=55 // pred_check
          %p1668 = pneg %p181
        $region58: #{tpu_custom_call.1} parent=55 // pred_check_branch
          %1670 = sbr.rel (%p1668) target = $region60
        $region59: #{tpu_custom_call.1} parent=55 // pred_region
          %s1671 = smul.u32 4, %s22
          %p1672 = scmp.lt.s32.totalorder %s1671, 7
          %s1673 = scalar_select %p1672, %s1671, 7
          %s1674 = smul.addr %s1673, 2
          %s1675 = smul.addr %s1674, 4
          %s1676 = scalar_lea.vmem %s6, %s1675
        $region60: #{tpu_custom_call.1} parent=55 // pred_fallthru
          _
      $region56: #{tpu_custom_call.1} parent=5 // pred_fallthru
        _
    $region6: #{tpu_custom_call.1} parent=1 // loop_footer
      %s20 = sadd.s32 1, %s16
    $region7: #{tpu_custom_call.1} parent=1 // loop_footer_branch
      %15 = sbr.rel target = $region3
    $region8: #{tpu_custom_call.1} parent=1 // loop_exit
      _
    %1677 = vsyncpa [#allocation4], 1
    %s1678 = scalar_lea.sflag [#allocation4], 1
    %1679 = vsyncpa %s1678, 1

</llo_original>
